<compile_context>
chip_gen: v7x
topology: tpu7x:2x2x1
jax: 0.10.0
libtpu: 0.0.40
codegen_flags: <defaults>
</compile_context>

<pallas_src>
import functools
import math

import numpy as np
import jax
import jax.numpy as jnp
from jax.experimental import pallas as pl
from jax.experimental.pallas import tpu as pltpu

NEG_SLOPE = 0.01  # PyTorch LeakyReLU default


def _round_up(x, m):
    return ((x + m - 1) // m) * m


def _const_spec(arr):
    n = arr.ndim
    return pl.BlockSpec(arr.shape, lambda *_: (0,) * n)


# ----------------------------------------------------------------------------
# Kernel 1: fused StatesEncoder x2 + PositionalEncoding + RSA + max over agents
# ----------------------------------------------------------------------------
def _encoder_rsa_kernel(agent_ref, group_ref, wa_ref, ba_ref, wg_ref, bg_ref,
                        pe_ref, wqkv_ref, bqkv_ref, wo_ref, bo_ref,
                        ssum_ref, bexp_ref, o_ref, *, num_agents, embed):
    A, E = num_agents, embed
    AE = A * E

    def leaky(v):
        return jnp.where(v > 0, v, NEG_SLOPE * v)

    def mm(x, w):  # bf16 MXU matmul, f32 accumulation
        return jnp.dot(x.astype(jnp.bfloat16), w, preferred_element_type=jnp.float32)

    wa, wg = wa_ref[...], wg_ref[...]
    ba, bg = ba_ref[...], bg_ref[...]

    # --- StatesEncoder (Linear + LeakyReLU) for agent and group-mate tokens --------
    a_tok = leaky(mm(agent_ref[...], wa) + ba)                       # (TM, E)
    g_toks = [leaky(mm(group_ref[j], wg) + bg) for j in range(A - 1)]

    # --- fold agent tokens into lanes, add positional encodings once ---------------
    x = jnp.concatenate([a_tok] + g_toks, axis=1) + pe_ref[...]      # (TM, A*E)

    # --- fused Q/K/V projection: one MXU dot against block-diagonal weights --------
    qkv = mm(x, wqkv_ref[...]) + bqkv_ref[...]                       # (TM, 3*A*E)
    q = qkv[:, 0:AE]
    k = qkv[:, AE:2 * AE]
    v = qkv[:, 2 * AE:3 * AE]

    # --- attention scores for all (query-agent, head) pairs via the MXU ------------
    ssum = ssum_ref[...]                                             # (A*E, AHp), scale folded in
    scores, v_reps = [], []
    for j in range(A):
        k_j = k[:, j * E:(j + 1) * E]
        v_j = v[:, j * E:(j + 1) * E]
        k_rep = jnp.concatenate([k_j] * A, axis=1)                   # (TM, A*E)
        v_reps.append(jnp.concatenate([v_j] * A, axis=1))
        scores.append(mm(q * k_rep, ssum))                           # (TM, AHp)

    # softmax over the key-agent axis (list index j)
    m = scores[0]
    for j in range(1, A):
        m = jnp.maximum(m, scores[j])
    exps = [jnp.exp(s - m) for s in scores]
    denom = exps[0]
    for j in range(1, A):
        denom = denom + exps[j]
    inv = pl.reciprocal(denom, approx=True)                          # EUP reciprocal

    # weighted sum of values; head weights broadcast back to lanes via 0/1 matrix
    bexp = bexp_ref[...]                                             # (AHp, A*E)
    attn = None
    for j in range(A):
        contrib = mm(exps[j] * inv, bexp) * v_reps[j]                # (TM, A*E)
        attn = contrib if attn is None else attn + contrib

    # --- output projection (block-diagonal) + residual ------------------------------
    out = mm(attn, wo_ref[...]) + bo_ref[...] + x                    # (TM, A*E)

    # --- torch.max(x, dim=1) over the agent/token axis -------------------------------
    y = out[:, 0:E]
    for s in range(1, A):
        y = jnp.maximum(y, out[:, s * E:(s + 1) * E])
    o_ref[...] = y


def encoder_rsa_forward(agent, group, kp, *, num_agents, embed, tile_rows=512):
    """agent: (N, F) f32; group: (A-1, N, F) f32 slot-major. Returns (N, embed)."""
    N, F = agent.shape
    A, E = num_agents, embed
    TM = min(tile_rows, _round_up(N, 8))
    N_pad = _round_up(N, TM)
    if N_pad != N:
        agent = jnp.pad(agent, ((0, N_pad - N), (0, 0)))
        group = jnp.pad(group, ((0, 0), (0, N_pad - N), (0, 0)))

    kern = functools.partial(_encoder_rsa_kernel, num_agents=A, embed=E)
    out = pl.pallas_call(
        kern,
        grid=(N_pad // TM,),
        in_specs=[
            pl.BlockSpec((TM, F), lambda i: (i, 0)),
            pl.BlockSpec((A - 1, TM, F), lambda i: (0, i, 0)),
            _const_spec(kp["wa"]), _const_spec(kp["ba"]),
            _const_spec(kp["wg"]), _const_spec(kp["bg"]),
            _const_spec(kp["pe"]),
            _const_spec(kp["wqkv"]), _const_spec(kp["bqkv"]),
            _const_spec(kp["wo"]), _const_spec(kp["bo"]),
            _const_spec(kp["ssum"]), _const_spec(kp["bexp"]),
        ],
        out_specs=pl.BlockSpec((TM, E), lambda i: (i, 0)),
        out_shape=jax.ShapeDtypeStruct((N_pad, E), jnp.float32),
        compiler_params=pltpu.CompilerParams(
            dimension_semantics=("parallel",),
            vmem_limit_bytes=64 * 1024 * 1024),
    )(agent, group, kp["wa"], kp["ba"], kp["wg"], kp["bg"], kp["pe"],
      kp["wqkv"], kp["bqkv"], kp["wo"], kp["bo"], kp["ssum"], kp["bexp"])
    return out[:N]


# ----------------------------------------------------------------------------
# Kernel 2: done-reset LSTM with fused DiscretePolicyNetwork head
# ----------------------------------------------------------------------------
def _lstm_policy_kernel(x_ref, d_ref, wih_ref, whh_ref, b_ref,
                        w1_ref, b1_ref, w2_ref, b2_ref,
                        probs_ref, h_out_ref, c_out_ref,
                        h_scr, c_scr, *, hidden, num_steps, chunk):
    H, Tc = hidden, chunk

    @pl.when(pl.program_id(0) == 0)
    def _():
        h_scr[...] = jnp.zeros_like(h_scr)
        c_scr[...] = jnp.zeros_like(c_scr)

    wih, whh, b = wih_ref[...], whh_ref[...], b_ref[...]
    w1, b1 = w1_ref[...], b1_ref[...]
    w2, b2 = w2_ref[...], b2_ref[...]

    # gate-type mask (True on the "g" / cell-candidate block), hoisted out of the loop
    col = jax.lax.broadcasted_iota(jnp.int32, (1, 4 * H), 1)
    g_mask = (col // H) == 2

    t0 = pl.program_id(0) * Tc

    def step(i, carry):
        h, c = carry
        keep = 1.0 - d_ref[i]                                        # (N2, 1) reset where done
        h = h * keep
        c = c * keep
        xt = x_ref[i]                                                # (N2, E)
        gates = (jnp.dot(xt.astype(jnp.bfloat16), wih, preferred_element_type=jnp.float32)
                 + jnp.dot(h.astype(jnp.bfloat16), whh, preferred_element_type=jnp.float32)
                 + b)                                                # (N2, 4H)
        # nonlinearity on the full 4H-wide vreg, split only afterwards
        act = jnp.where(g_mask, jnp.tanh(gates), jax.nn.sigmoid(gates))
        i_g = act[:, 0 * H:1 * H]
        f_g = act[:, 1 * H:2 * H]
        g_g = act[:, 2 * H:3 * H]
        o_g = act[:, 3 * H:4 * H]
        c_new = f_g * c + i_g * g_g
        h_new = o_g * jnp.tanh(c_new)

        # keep previous state on padded timesteps (S not divisible by the chunk size)
        vf = (t0 + i < num_steps).astype(jnp.float32)
        h_new = h + vf * (h_new - h)
        c_new = c + vf * (c_new - c)

        # fused DiscretePolicyNetwork: Linear -> ReLU -> Linear -> Softmax
        ph = jnp.maximum(
            jnp.dot(h_new.astype(jnp.bfloat16), w1, preferred_element_type=jnp.float32) + b1,
            0.0)
        logits = jnp.dot(ph.astype(jnp.bfloat16), w2, preferred_element_type=jnp.float32) + b2
        mx = jnp.max(logits, axis=-1, keepdims=True)
        e = jnp.exp(logits - mx)                                     # padded action cols -> 0
        probs_ref[i] = e / jnp.sum(e, axis=-1, keepdims=True)        # exact normalization
        return h_new, c_new

    h_fin, c_fin = jax.lax.fori_loop(0, Tc, step, (h_scr[...], c_scr[...]), unroll=True)
    h_scr[...] = h_fin
    c_scr[...] = c_fin
    h_out_ref[...] = h_fin
    c_out_ref[...] = c_fin


def lstm_policy_forward(x, dones, kp, *, chunk=8):
    """x: (S, N2, E), dones: (S, N2, 1). Returns (probs (S, N2, P), h_n, c_n)."""
    S, N2, E = x.shape
    H = kp["whh"].shape[0]
    P = kp["w2"].shape[1]
    Tc = min(chunk, S)
    S_pad = _round_up(S, Tc)
    if S_pad != S:
        x = jnp.pad(x, ((0, S_pad - S), (0, 0), (0, 0)))
        dones = jnp.pad(dones, ((0, S_pad - S), (0, 0), (0, 0)))

    kern = functools.partial(_lstm_policy_kernel, hidden=H, num_steps=S, chunk=Tc)
    probs, h_n, c_n = pl.pallas_call(
        kern,
        grid=(S_pad // Tc,),
        in_specs=[
            pl.BlockSpec((Tc, N2, E), lambda t: (t, 0, 0)),
            pl.BlockSpec((Tc, N2, 1), lambda t: (t, 0, 0)),
            _const_spec(kp["wih"]), _const_spec(kp["whh"]), _const_spec(kp["b"]),
            _const_spec(kp["w1"]), _const_spec(kp["b1"]),
            _const_spec(kp["w2"]), _const_spec(kp["b2"]),
        ],
        out_specs=(
            pl.BlockSpec((Tc, N2, P), lambda t: (t, 0, 0)),          # lane-dense (P = 128k)
            pl.BlockSpec((N2, H), lambda t: (0, 0)),
            pl.BlockSpec((N2, H), lambda t: (0, 0)),
        ),
        out_shape=(jax.ShapeDtypeStruct((S_pad, N2, P), jnp.float32),
                   jax.ShapeDtypeStruct((N2, H), jnp.float32),
                   jax.ShapeDtypeStruct((N2, H), jnp.float32)),
        scratch_shapes=[pltpu.VMEM((N2, H), jnp.float32),
                        pltpu.VMEM((N2, H), jnp.float32)],
        compiler_params=pltpu.CompilerParams(
            dimension_semantics=("arbitrary",),
            vmem_limit_bytes=64 * 1024 * 1024),
    )(x, dones, kp["wih"], kp["whh"], kp["b"], kp["w1"], kp["b1"], kp["w2"], kp["b2"])
    return probs[:S], h_n, c_n


# ----------------------------------------------------------------------------
# Glue (plain JAX): parameter packing, positional encodings, state splitting.
# ----------------------------------------------------------------------------
def sinusoidal_positional_encoding(max_len, d_model):
    position = np.arange(max_len, dtype=np.float32)[:, None]
    div_term = np.exp(np.arange(0, d_model, 2, dtype=np.float32) * (-math.log(10000.0) / d_model))
    pe = np.zeros((max_len, d_model), dtype=np.float32)
    pe[:, 0::2] = np.sin(position * div_term)
    pe[:, 1::2] = np.cos(position * div_term)
    return jnp.asarray(pe)


def init_params(key, cfg):
    F, E = cfg["state_size"], cfg["embed_size"]
    H, hid, nact = cfg["lstm_hidden"], cfg["policy_hidden"], cfg["num_actions"]

    def dense(k, fan_in, fan_out):
        k1, k2 = jax.random.split(k)
        w = jax.random.normal(k1, (fan_in, fan_out), jnp.float32) / math.sqrt(fan_in)
        b = jax.random.normal(k2, (fan_out,), jnp.float32) * 0.01
        return w, b

    keys = jax.random.split(key, 16)
    p = {}
    w, b = dense(keys[0], F, E); p["enc_agent"] = {"w": w, "b": b}
    w, b = dense(keys[1], F, E); p["enc_group"] = {"w": w, "b": b}
    rsa = {}
    for i, name in enumerate(["q", "k", "v", "o"]):
        w, b = dense(keys[2 + i], E, E)
        rsa["w" + name] = w
        rsa["b" + name] = b
    p["rsa"] = rsa
    wih, bih = dense(keys[6], E, 4 * H)
    whh, bhh = dense(keys[7], H, 4 * H)
    p["lstm"] = {"wih": wih, "whh": whh, "bih": bih, "bhh": bhh}
    w1, b1 = dense(keys[8], H, hid)
    w2, b2 = dense(keys[9], hid, nact)
    p["policy"] = {"w1": w1, "b1": b1, "w2": w2, "b2": b2}
    p["pe"] = sinusoidal_positional_encoding(cfg["max_agents"], E)
    return p


def prepare_kernel_params(params, cfg, num_agents):
    """Pack params into the kernel-ready layout (bf16 matmul weights, block-diag RSA)."""
    A = num_agents
    E, Hh = cfg["embed_size"], cfg["heads"]
    H, hid, nact = cfg["lstm_hidden"], cfg["policy_hidden"], cfg["num_actions"]
    assert A >= 2 and E % Hh == 0
    D = E // Hh
    bf = jnp.bfloat16
    eye = jnp.eye(A, dtype=jnp.float32)
    kron_bd = lambda w: jnp.kron(eye, w)

    rsa = params["rsa"]
    wqkv = jnp.concatenate([kron_bd(rsa["wq"]), kron_bd(rsa["wk"]), kron_bd(rsa["wv"])], axis=1)
    bqkv = jnp.concatenate([jnp.tile(rsa["bq"], A), jnp.tile(rsa["bk"], A),
                            jnp.tile(rsa["bv"], A)]).reshape(1, 3 * A * E)
    wo_bd = kron_bd(rsa["wo"])
    bo_rep = jnp.tile(rsa["bo"], A).reshape(1, A * E)

    # static head-sum (scores) and head-broadcast (attention weights) matrices
    AHp = _round_up(A * Hh, 8)
    ssum_np = np.zeros((A * E, AHp), np.float32)
    for i in range(A):
        for h in range(Hh):
            ssum_np[i * E + h * D:i * E + (h + 1) * D, i * Hh + h] = 1.0
    bexp = jnp.asarray((ssum_np > 0).astype(np.float32).T, dtype=bf)   # (AHp, A*E)
    ssum = jnp.asarray(ssum_np / math.sqrt(D), dtype=bf)               # scale folded in

    P = _round_up(nact, 128)                                           # lane-dense probs
    w2p = jnp.zeros((hid, P), jnp.float32).at[:, :nact].set(params["policy"]["w2"])
    b2p = jnp.full((1, P), -1e30, jnp.float32).at[0, :nact].set(params["policy"]["b2"])

    return {
        "enc": {
            "wa": params["enc_agent"]["w"].astype(bf),
            "ba": params["enc_agent"]["b"].reshape(1, E),
            "wg": params["enc_group"]["w"].astype(bf),
            "bg": params["enc_group"]["b"].reshape(1, E),
            "pe": params["pe"][:A].reshape(1, A * E),
            "wqkv": wqkv.astype(bf), "bqkv": bqkv,
            "wo": wo_bd.astype(bf), "bo": bo_rep,
            "ssum": ssum, "bexp": bexp,
        },
        "lstm": {
            "wih": params["lstm"]["wih"].astype(bf),
            "whh": params["lstm"]["whh"].astype(bf),
            "b": (params["lstm"]["bih"] + params["lstm"]["bhh"]).reshape(1, 4 * H),
            "w1": params["policy"]["w1"].astype(bf),
            "b1": params["policy"]["b1"].reshape(1, hid),
            "w2": w2p.astype(bf),
            "b2": b2p,
        },
    }


def policy_network_lstm_forward(params, states, terminals, cfg):
    """Equivalent of PolicyNetworkLSTM.probabilities(states, ...). Returns (probs, (h, c))."""
    S, Env, A, F = states.shape
    E, heads = cfg["embed_size"], cfg["heads"]
    nact = cfg["num_actions"]
    N = S * Env * A
    N2 = Env * A

    kp = prepare_kernel_params(params, cfg, A)

    # AgentGroupMatesStates: agent rows + slot-major group-mate rows (plain JAX glue)
    agent = states.reshape(N, F)
    others = np.array([[j for j in range(A) if j != i] for i in range(A)], dtype=np.int32)
    group = states[:, :, others, :]                                  # (S, Env, A, A-1, F)
    group = jnp.transpose(group, (3, 0, 1, 2, 4)).reshape(A - 1, N, F)

    # kernel 1: encoders + PE + RSA + max over agents
    y = encoder_rsa_forward(agent, group, kp["enc"], num_agents=A, embed=E)   # (N, E)

    # kernel 2: done-reset LSTM + policy head
    x_seq = y.reshape(S, N2, E)
    dones = jnp.repeat(terminals.astype(jnp.float32), A, axis=2).reshape(S, N2, 1)
    probs_pad, h_n, c_n = lstm_policy_forward(x_seq, dones, kp["lstm"])

    probs = probs_pad[:, :, :nact].reshape(S, Env, A, nact)
    return probs, (h_n[None], c_n[None])


if __name__ == "__main__":
    cfg = dict(state_size=8, embed_size=32, heads=2, lstm_hidden=32,
               policy_hidden=32, num_actions=5, max_agents=8)
    S, Env, A = 4, 2, 3  # num_steps, num_envs, num_agents

    key = jax.random.PRNGKey(0)
    k_param, k_state, k_done = jax.random.split(key, 3)
    params = init_params(k_param, cfg)

    states = jax.random.normal(k_state, (S, Env, A, cfg["state_size"]), jnp.float32)
    terminals = jax.random.bernoulli(k_done, 0.3, (S, Env, 1)).astype(jnp.float32)

    probs, (h_n, c_n) = policy_network_lstm_forward(params, states, terminals, cfg)
    jax.block_until_ready((probs, h_n, c_n))

    assert probs.shape == (S, Env, A, cfg["num_actions"])
    assert h_n.shape == (1, Env * A, cfg["lstm_hidden"])
    assert bool(jnp.all(jnp.isfinite(probs)))
    assert bool(jnp.allclose(jnp.sum(probs, axis=-1), 1.0, atol=1e-3))
    print("KERNEL_OK")
</pallas_src>

<mosaic_0001>
module attributes {stable_mosaic.version = 11 : i64} {
  func.func @_encoder_rsa_kernel(%arg0: i32, %arg1: memref<24x8xf32, #tpu.memory_space<vmem>>, %arg2: memref<2x24x8xf32, #tpu.memory_space<vmem>>, %arg3: memref<8x32xbf16, #tpu.memory_space<vmem>>, %arg4: memref<1x32xf32, #tpu.memory_space<vmem>>, %arg5: memref<8x32xbf16, #tpu.memory_space<vmem>>, %arg6: memref<1x32xf32, #tpu.memory_space<vmem>>, %arg7: memref<1x96xf32, #tpu.memory_space<vmem>>, %arg8: memref<96x288xbf16, #tpu.memory_space<vmem>>, %arg9: memref<1x288xf32, #tpu.memory_space<vmem>>, %arg10: memref<96x96xbf16, #tpu.memory_space<vmem>>, %arg11: memref<1x96xf32, #tpu.memory_space<vmem>>, %arg12: memref<96x8xbf16, #tpu.memory_space<vmem>>, %arg13: memref<8x96xbf16, #tpu.memory_space<vmem>>, %arg14: memref<24x32xf32, #tpu.memory_space<vmem>>) attributes {dimension_semantics = [#tpu.dimension_semantics<parallel>], iteration_bounds = array<i64: 1>, scalar_prefetch = 0 : i64, scratch_operands = 0 : i64, tpu.core_type = #tpu.core_type<tc>, window_params = [{transform_indices = @transform_0, window_bounds = array<i64: 24, 8>}, {transform_indices = @transform_1, window_bounds = array<i64: 2, 24, 8>}, {pipeline_mode = #tpu.pipeline_mode<synchronous>, transform_indices = @transform_2, window_bounds = array<i64: 8, 32>}, {pipeline_mode = #tpu.pipeline_mode<synchronous>, transform_indices = @transform_3, window_bounds = array<i64: 1, 32>}, {pipeline_mode = #tpu.pipeline_mode<synchronous>, transform_indices = @transform_4, window_bounds = array<i64: 8, 32>}, {pipeline_mode = #tpu.pipeline_mode<synchronous>, transform_indices = @transform_5, window_bounds = array<i64: 1, 32>}, {pipeline_mode = #tpu.pipeline_mode<synchronous>, transform_indices = @transform_6, window_bounds = array<i64: 1, 96>}, {pipeline_mode = #tpu.pipeline_mode<synchronous>, transform_indices = @transform_7, window_bounds = array<i64: 96, 288>}, {pipeline_mode = #tpu.pipeline_mode<synchronous>, transform_indices = @transform_8, window_bounds = array<i64: 1, 288>}, {pipeline_mode = #tpu.pipeline_mode<synchronous>, transform_indices = @transform_9, window_bounds = array<i64: 96, 96>}, {pipeline_mode = #tpu.pipeline_mode<synchronous>, transform_indices = @transform_10, window_bounds = array<i64: 1, 96>}, {pipeline_mode = #tpu.pipeline_mode<synchronous>, transform_indices = @transform_11, window_bounds = array<i64: 96, 8>}, {pipeline_mode = #tpu.pipeline_mode<synchronous>, transform_indices = @transform_12, window_bounds = array<i64: 8, 96>}, {transform_indices = @transform_13, window_bounds = array<i64: 24, 32>}]} {
    %c0 = arith.constant 0 : index
    %c0_0 = arith.constant 0 : index
    %0 = vector.load %arg3[%c0, %c0_0] : memref<8x32xbf16, #tpu.memory_space<vmem>>, vector<8x32xbf16>
    %c0_1 = arith.constant 0 : index
    %c0_2 = arith.constant 0 : index
    %1 = vector.load %arg5[%c0_1, %c0_2] : memref<8x32xbf16, #tpu.memory_space<vmem>>, vector<8x32xbf16>
    %c0_3 = arith.constant 0 : index
    %c0_4 = arith.constant 0 : index
    %2 = vector.load %arg4[%c0_3, %c0_4] : memref<1x32xf32, #tpu.memory_space<vmem>>, vector<1x32xf32>
    %c0_5 = arith.constant 0 : index
    %c0_6 = arith.constant 0 : index
    %3 = vector.load %arg6[%c0_5, %c0_6] : memref<1x32xf32, #tpu.memory_space<vmem>>, vector<1x32xf32>
    %c0_7 = arith.constant 0 : index
    %c0_8 = arith.constant 0 : index
    %4 = vector.load %arg1[%c0_7, %c0_8] : memref<24x8xf32, #tpu.memory_space<vmem>>, vector<24x8xf32>
    %5 = arith.truncf %4 : vector<24x8xf32> to vector<24x8xbf16>
    %cst = arith.constant dense<0.000000e+00> : vector<24x32xf32>
    %6 = tpu.matmul %5, %0, %cst {dimension_numbers = #tpu.dot_dimension_numbers<[1], [0], [0], [1], [0, 0, 1, 1], [], []>} : vector<24x8xbf16>, vector<8x32xbf16>, vector<24x32xf32> -> vector<24x32xf32>
    %7 = vector.broadcast %2 : vector<1x32xf32> to vector<24x32xf32>
    %8 = arith.addf %6, %7 : vector<24x32xf32>
    %cst_9 = arith.constant 0.000000e+00 : f32
    %9 = vector.broadcast %cst_9 : f32 to vector<24x32xf32>
    %10 = arith.cmpf ogt, %8, %9 : vector<24x32xf32>
    %cst_10 = arith.constant 0.00999999977 : f32
    %11 = vector.broadcast %cst_10 : f32 to vector<24x32xf32>
    %12 = arith.mulf %11, %8 : vector<24x32xf32>
    %13 = arith.select %10, %8, %12 : vector<24x32xi1>, vector<24x32xf32>
    %c0_11 = arith.constant 0 : index
    %c0_12 = arith.constant 0 : index
    %c0_13 = arith.constant 0 : index
    %14 = vector.load %arg2[%c0_11, %c0_12, %c0_13] : memref<2x24x8xf32, #tpu.memory_space<vmem>>, vector<1x24x8xf32>
    %15 = vector.shape_cast %14 : vector<1x24x8xf32> to vector<24x8xf32>
    %16 = arith.truncf %15 : vector<24x8xf32> to vector<24x8xbf16>
    %cst_14 = arith.constant dense<0.000000e+00> : vector<24x32xf32>
    %17 = tpu.matmul %16, %1, %cst_14 {dimension_numbers = #tpu.dot_dimension_numbers<[1], [0], [0], [1], [0, 0, 1, 1], [], []>} : vector<24x8xbf16>, vector<8x32xbf16>, vector<24x32xf32> -> vector<24x32xf32>
    %18 = vector.broadcast %3 : vector<1x32xf32> to vector<24x32xf32>
    %19 = arith.addf %17, %18 : vector<24x32xf32>
    %cst_15 = arith.constant 0.000000e+00 : f32
    %20 = vector.broadcast %cst_15 : f32 to vector<24x32xf32>
    %21 = arith.cmpf ogt, %19, %20 : vector<24x32xf32>
    %cst_16 = arith.constant 0.00999999977 : f32
    %22 = vector.broadcast %cst_16 : f32 to vector<24x32xf32>
    %23 = arith.mulf %22, %19 : vector<24x32xf32>
    %24 = arith.select %21, %19, %23 : vector<24x32xi1>, vector<24x32xf32>
    %c1 = arith.constant 1 : index
    %c0_17 = arith.constant 0 : index
    %c0_18 = arith.constant 0 : index
    %25 = vector.load %arg2[%c1, %c0_17, %c0_18] : memref<2x24x8xf32, #tpu.memory_space<vmem>>, vector<1x24x8xf32>
    %26 = vector.shape_cast %25 : vector<1x24x8xf32> to vector<24x8xf32>
    %27 = arith.truncf %26 : vector<24x8xf32> to vector<24x8xbf16>
    %cst_19 = arith.constant dense<0.000000e+00> : vector<24x32xf32>
    %28 = tpu.matmul %27, %1, %cst_19 {dimension_numbers = #tpu.dot_dimension_numbers<[1], [0], [0], [1], [0, 0, 1, 1], [], []>} : vector<24x8xbf16>, vector<8x32xbf16>, vector<24x32xf32> -> vector<24x32xf32>
    %29 = vector.broadcast %3 : vector<1x32xf32> to vector<24x32xf32>
    %30 = arith.addf %28, %29 : vector<24x32xf32>
    %cst_20 = arith.constant 0.000000e+00 : f32
    %31 = vector.broadcast %cst_20 : f32 to vector<24x32xf32>
    %32 = arith.cmpf ogt, %30, %31 : vector<24x32xf32>
    %cst_21 = arith.constant 0.00999999977 : f32
    %33 = vector.broadcast %cst_21 : f32 to vector<24x32xf32>
    %34 = arith.mulf %33, %30 : vector<24x32xf32>
    %35 = arith.select %32, %30, %34 : vector<24x32xi1>, vector<24x32xf32>
    %36 = tpu.concatenate %13, %24, %35 in 1 : vector<24x32xf32>, vector<24x32xf32>, vector<24x32xf32> -> vector<24x96xf32>
    %c0_22 = arith.constant 0 : index
    %c0_23 = arith.constant 0 : index
    %37 = vector.load %arg7[%c0_22, %c0_23] : memref<1x96xf32, #tpu.memory_space<vmem>>, vector<1x96xf32>
    %38 = vector.broadcast %37 : vector<1x96xf32> to vector<24x96xf32>
    %39 = arith.addf %36, %38 : vector<24x96xf32>
    %c0_24 = arith.constant 0 : index
    %c0_25 = arith.constant 0 : index
    %40 = vector.load %arg8[%c0_24, %c0_25] : memref<96x288xbf16, #tpu.memory_space<vmem>>, vector<96x288xbf16>
    %41 = arith.truncf %39 : vector<24x96xf32> to vector<24x96xbf16>
    %cst_26 = arith.constant dense<0.000000e+00> : vector<24x288xf32>
    %42 = tpu.matmul %41, %40, %cst_26 {dimension_numbers = #tpu.dot_dimension_numbers<[1], [0], [0], [1], [0, 0, 1, 1], [], []>} : vector<24x96xbf16>, vector<96x288xbf16>, vector<24x288xf32> -> vector<24x288xf32>
    %c0_27 = arith.constant 0 : index
    %c0_28 = arith.constant 0 : index
    %43 = vector.load %arg9[%c0_27, %c0_28] : memref<1x288xf32, #tpu.memory_space<vmem>>, vector<1x288xf32>
    %44 = vector.broadcast %43 : vector<1x288xf32> to vector<24x288xf32>
    %45 = arith.addf %42, %44 : vector<24x288xf32>
    %46 = vector.extract_strided_slice %45 {offsets = [0, 0], sizes = [24, 96], strides = [1, 1]} : vector<24x288xf32> to vector<24x96xf32>
    %47 = vector.extract_strided_slice %45 {offsets = [0, 96], sizes = [24, 96], strides = [1, 1]} : vector<24x288xf32> to vector<24x96xf32>
    %48 = vector.extract_strided_slice %45 {offsets = [0, 192], sizes = [24, 96], strides = [1, 1]} : vector<24x288xf32> to vector<24x96xf32>
    %c0_29 = arith.constant 0 : index
    %c0_30 = arith.constant 0 : index
    %49 = vector.load %arg12[%c0_29, %c0_30] : memref<96x8xbf16, #tpu.memory_space<vmem>>, vector<96x8xbf16>
    %50 = vector.extract_strided_slice %47 {offsets = [0, 0], sizes = [24, 32], strides = [1, 1]} : vector<24x96xf32> to vector<24x32xf32>
    %51 = vector.extract_strided_slice %48 {offsets = [0, 0], sizes = [24, 32], strides = [1, 1]} : vector<24x96xf32> to vector<24x32xf32>
    %52 = tpu.concatenate %50, %50, %50 in 1 : vector<24x32xf32>, vector<24x32xf32>, vector<24x32xf32> -> vector<24x96xf32>
    %53 = tpu.concatenate %51, %51, %51 in 1 : vector<24x32xf32>, vector<24x32xf32>, vector<24x32xf32> -> vector<24x96xf32>
    %54 = arith.mulf %46, %52 : vector<24x96xf32>
    %55 = arith.truncf %54 : vector<24x96xf32> to vector<24x96xbf16>
    %cst_31 = arith.constant dense<0.000000e+00> : vector<24x8xf32>
    %56 = tpu.matmul %55, %49, %cst_31 {dimension_numbers = #tpu.dot_dimension_numbers<[1], [0], [0], [1], [0, 0, 1, 1], [], []>} : vector<24x96xbf16>, vector<96x8xbf16>, vector<24x8xf32> -> vector<24x8xf32>
    %57 = vector.extract_strided_slice %47 {offsets = [0, 32], sizes = [24, 32], strides = [1, 1]} : vector<24x96xf32> to vector<24x32xf32>
    %58 = vector.extract_strided_slice %48 {offsets = [0, 32], sizes = [24, 32], strides = [1, 1]} : vector<24x96xf32> to vector<24x32xf32>
    %59 = tpu.concatenate %57, %57, %57 in 1 : vector<24x32xf32>, vector<24x32xf32>, vector<24x32xf32> -> vector<24x96xf32>
    %60 = tpu.concatenate %58, %58, %58 in 1 : vector<24x32xf32>, vector<24x32xf32>, vector<24x32xf32> -> vector<24x96xf32>
    %61 = arith.mulf %46, %59 : vector<24x96xf32>
    %62 = arith.truncf %61 : vector<24x96xf32> to vector<24x96xbf16>
    %cst_32 = arith.constant dense<0.000000e+00> : vector<24x8xf32>
    %63 = tpu.matmul %62, %49, %cst_32 {dimension_numbers = #tpu.dot_dimension_numbers<[1], [0], [0], [1], [0, 0, 1, 1], [], []>} : vector<24x96xbf16>, vector<96x8xbf16>, vector<24x8xf32> -> vector<24x8xf32>
    %64 = vector.extract_strided_slice %47 {offsets = [0, 64], sizes = [24, 32], strides = [1, 1]} : vector<24x96xf32> to vector<24x32xf32>
    %65 = vector.extract_strided_slice %48 {offsets = [0, 64], sizes = [24, 32], strides = [1, 1]} : vector<24x96xf32> to vector<24x32xf32>
    %66 = tpu.concatenate %64, %64, %64 in 1 : vector<24x32xf32>, vector<24x32xf32>, vector<24x32xf32> -> vector<24x96xf32>
    %67 = tpu.concatenate %65, %65, %65 in 1 : vector<24x32xf32>, vector<24x32xf32>, vector<24x32xf32> -> vector<24x96xf32>
    %68 = arith.mulf %46, %66 : vector<24x96xf32>
    %69 = arith.truncf %68 : vector<24x96xf32> to vector<24x96xbf16>
    %cst_33 = arith.constant dense<0.000000e+00> : vector<24x8xf32>
    %70 = tpu.matmul %69, %49, %cst_33 {dimension_numbers = #tpu.dot_dimension_numbers<[1], [0], [0], [1], [0, 0, 1, 1], [], []>} : vector<24x96xbf16>, vector<96x8xbf16>, vector<24x8xf32> -> vector<24x8xf32>
    %71 = arith.maximumf %56, %63 : vector<24x8xf32>
    %72 = arith.maximumf %71, %70 : vector<24x8xf32>
    %73 = arith.subf %56, %72 : vector<24x8xf32>
    %74 = math.exp %73 : vector<24x8xf32>
    %75 = arith.subf %63, %72 : vector<24x8xf32>
    %76 = math.exp %75 : vector<24x8xf32>
    %77 = arith.subf %70, %72 : vector<24x8xf32>
    %78 = math.exp %77 : vector<24x8xf32>
    %79 = arith.addf %74, %76 : vector<24x8xf32>
    %80 = arith.addf %79, %78 : vector<24x8xf32>
    %81 = tpu.reciprocal %80 {approx = true} : vector<24x8xf32> -> vector<24x8xf32>
    %c0_34 = arith.constant 0 : index
    %c0_35 = arith.constant 0 : index
    %82 = vector.load %arg13[%c0_34, %c0_35] : memref<8x96xbf16, #tpu.memory_space<vmem>>, vector<8x96xbf16>
    %83 = arith.mulf %74, %81 : vector<24x8xf32>
    %84 = arith.truncf %83 : vector<24x8xf32> to vector<24x8xbf16>
    %cst_36 = arith.constant dense<0.000000e+00> : vector<24x96xf32>
    %85 = tpu.matmul %84, %82, %cst_36 {dimension_numbers = #tpu.dot_dimension_numbers<[1], [0], [0], [1], [0, 0, 1, 1], [], []>} : vector<24x8xbf16>, vector<8x96xbf16>, vector<24x96xf32> -> vector<24x96xf32>
    %86 = arith.mulf %85, %53 : vector<24x96xf32>
    %87 = arith.mulf %76, %81 : vector<24x8xf32>
    %88 = arith.truncf %87 : vector<24x8xf32> to vector<24x8xbf16>
    %cst_37 = arith.constant dense<0.000000e+00> : vector<24x96xf32>
    %89 = tpu.matmul %88, %82, %cst_37 {dimension_numbers = #tpu.dot_dimension_numbers<[1], [0], [0], [1], [0, 0, 1, 1], [], []>} : vector<24x8xbf16>, vector<8x96xbf16>, vector<24x96xf32> -> vector<24x96xf32>
    %90 = arith.mulf %89, %60 : vector<24x96xf32>
    %91 = arith.addf %86, %90 : vector<24x96xf32>
    %92 = arith.mulf %78, %81 : vector<24x8xf32>
    %93 = arith.truncf %92 : vector<24x8xf32> to vector<24x8xbf16>
    %cst_38 = arith.constant dense<0.000000e+00> : vector<24x96xf32>
    %94 = tpu.matmul %93, %82, %cst_38 {dimension_numbers = #tpu.dot_dimension_numbers<[1], [0], [0], [1], [0, 0, 1, 1], [], []>} : vector<24x8xbf16>, vector<8x96xbf16>, vector<24x96xf32> -> vector<24x96xf32>
    %95 = arith.mulf %94, %67 : vector<24x96xf32>
    %96 = arith.addf %91, %95 : vector<24x96xf32>
    %c0_39 = arith.constant 0 : index
    %c0_40 = arith.constant 0 : index
    %97 = vector.load %arg10[%c0_39, %c0_40] : memref<96x96xbf16, #tpu.memory_space<vmem>>, vector<96x96xbf16>
    %98 = arith.truncf %96 : vector<24x96xf32> to vector<24x96xbf16>
    %cst_41 = arith.constant dense<0.000000e+00> : vector<24x96xf32>
    %99 = tpu.matmul %98, %97, %cst_41 {dimension_numbers = #tpu.dot_dimension_numbers<[1], [0], [0], [1], [0, 0, 1, 1], [], []>} : vector<24x96xbf16>, vector<96x96xbf16>, vector<24x96xf32> -> vector<24x96xf32>
    %c0_42 = arith.constant 0 : index
    %c0_43 = arith.constant 0 : index
    %100 = vector.load %arg11[%c0_42, %c0_43] : memref<1x96xf32, #tpu.memory_space<vmem>>, vector<1x96xf32>
    %101 = vector.broadcast %100 : vector<1x96xf32> to vector<24x96xf32>
    %102 = arith.addf %99, %101 : vector<24x96xf32>
    %103 = arith.addf %102, %39 : vector<24x96xf32>
    %104 = vector.extract_strided_slice %103 {offsets = [0, 0], sizes = [24, 32], strides = [1, 1]} : vector<24x96xf32> to vector<24x32xf32>
    %105 = vector.extract_strided_slice %103 {offsets = [0, 32], sizes = [24, 32], strides = [1, 1]} : vector<24x96xf32> to vector<24x32xf32>
    %106 = arith.maximumf %104, %105 : vector<24x32xf32>
    %107 = vector.extract_strided_slice %103 {offsets = [0, 64], sizes = [24, 32], strides = [1, 1]} : vector<24x96xf32> to vector<24x32xf32>
    %108 = arith.maximumf %106, %107 : vector<24x32xf32>
    %c0_44 = arith.constant 0 : index
    %c0_45 = arith.constant 0 : index
    %109 = vector.load %arg14[%c0_44, %c0_45] : memref<24x32xf32, #tpu.memory_space<vmem>>, vector<24x32xf32>
    tpu.vector_store %arg14[%c0_44, %c0_45], %108 {strides = array<i32>} : memref<24x32xf32, #tpu.memory_space<vmem>>, vector<24x32xf32>,
    return
  }
  func.func @transform_0(%arg0: i32) -> (i32, i32) {
    %c0_i32 = arith.constant 0 : i32
    %c0_i32_0 = arith.constant 0 : i32
    return %arg0, %c0_i32 : i32, i32
  }
  func.func @transform_1(%arg0: i32) -> (i32, i32, i32) {
    %c0_i32 = arith.constant 0 : i32
    %c0_i32_0 = arith.constant 0 : i32
    %c0_i32_1 = arith.constant 0 : i32
    return %c0_i32, %arg0, %c0_i32_0 : i32, i32, i32
  }
  func.func @transform_2(%arg0: i32) -> (i32, i32) {
    %c0_i32 = arith.constant 0 : i32
    %c0_i32_0 = arith.constant 0 : i32
    %c0_i32_1 = arith.constant 0 : i32
    return %c0_i32, %c0_i32_0 : i32, i32
  }
  func.func @transform_3(%arg0: i32) -> (i32, i32) {
    %c0_i32 = arith.constant 0 : i32
    %c0_i32_0 = arith.constant 0 : i32
    %c0_i32_1 = arith.constant 0 : i32
    return %c0_i32, %c0_i32_0 : i32, i32
  }
  func.func @transform_4(%arg0: i32) -> (i32, i32) {
    %c0_i32 = arith.constant 0 : i32
    %c0_i32_0 = arith.constant 0 : i32
    %c0_i32_1 = arith.constant 0 : i32
    return %c0_i32, %c0_i32_0 : i32, i32
  }
  func.func @transform_5(%arg0: i32) -> (i32, i32) {
    %c0_i32 = arith.constant 0 : i32
    %c0_i32_0 = arith.constant 0 : i32
    %c0_i32_1 = arith.constant 0 : i32
    return %c0_i32, %c0_i32_0 : i32, i32
  }
  func.func @transform_6(%arg0: i32) -> (i32, i32) {
    %c0_i32 = arith.constant 0 : i32
    %c0_i32_0 = arith.constant 0 : i32
    %c0_i32_1 = arith.constant 0 : i32
    return %c0_i32, %c0_i32_0 : i32, i32
  }
  func.func @transform_7(%arg0: i32) -> (i32, i32) {
    %c0_i32 = arith.constant 0 : i32
    %c0_i32_0 = arith.constant 0 : i32
    %c0_i32_1 = arith.constant 0 : i32
    return %c0_i32, %c0_i32_0 : i32, i32
  }
  func.func @transform_8(%arg0: i32) -> (i32, i32) {
    %c0_i32 = arith.constant 0 : i32
    %c0_i32_0 = arith.constant 0 : i32
    %c0_i32_1 = arith.constant 0 : i32
    return %c0_i32, %c0_i32_0 : i32, i32
  }
  func.func @transform_9(%arg0: i32) -> (i32, i32) {
    %c0_i32 = arith.constant 0 : i32
    %c0_i32_0 = arith.constant 0 : i32
    %c0_i32_1 = arith.constant 0 : i32
    return %c0_i32, %c0_i32_0 : i32, i32
  }
  func.func @transform_10(%arg0: i32) -> (i32, i32) {
    %c0_i32 = arith.constant 0 : i32
    %c0_i32_0 = arith.constant 0 : i32
    %c0_i32_1 = arith.constant 0 : i32
    return %c0_i32, %c0_i32_0 : i32, i32
  }
  func.func @transform_11(%arg0: i32) -> (i32, i32) {
    %c0_i32 = arith.constant 0 : i32
    %c0_i32_0 = arith.constant 0 : i32
    %c0_i32_1 = arith.constant 0 : i32
    return %c0_i32, %c0_i32_0 : i32, i32
  }
  func.func @transform_12(%arg0: i32) -> (i32, i32) {
    %c0_i32 = arith.constant 0 : i32
    %c0_i32_0 = arith.constant 0 : i32
    %c0_i32_1 = arith.constant 0 : i32
    return %c0_i32, %c0_i32_0 : i32, i32
  }
  func.func @transform_13(%arg0: i32) -> (i32, i32) {
    %c0_i32 = arith.constant 0 : i32
    %c0_i32_0 = arith.constant 0 : i32
    return %arg0, %c0_i32 : i32, i32
  }
}

</mosaic_0001>

<llo_original>
// kernel: tpu_custom_call.1
$region0: #{tpu_custom_call.1}
  #allocation0 [shape = 'u32[]', space=smem, size = 0x4, offset = 0x4, fixed_abs, tag = 'smem constant byte address 0x4 - core index']
  #allocation1 [shape = 'u32[144,128]{1,0:T(1,128)}', space=vmem, size = 0x12000, scoped, tag = 'internal scratch']
  %s0 = inlined_call_operand.hbm [shape: f32[24,8], index: 0, kind: input, shape index: {}]
  %s1 = inlined_call_operand.hbm [shape: f32[2,24,8], index: 1, kind: input, shape index: {}]
  %s2 = inlined_call_operand.hbm [shape: bf16[8,32], index: 2, kind: input, shape index: {}]
  %s3 = inlined_call_operand.hbm [shape: f32[1,32], index: 3, kind: input, shape index: {}]
  %s4 = inlined_call_operand.hbm [shape: bf16[8,32], index: 4, kind: input, shape index: {}]
  %s5 = inlined_call_operand.hbm [shape: f32[1,32], index: 5, kind: input, shape index: {}]
  %s6 = inlined_call_operand.hbm [shape: f32[1,96], index: 6, kind: input, shape index: {}]
  %s7 = inlined_call_operand.hbm [shape: bf16[96,288], index: 7, kind: input, shape index: {}]
  %s8 = inlined_call_operand.hbm [shape: f32[1,288], index: 8, kind: input, shape index: {}]
  %s9 = inlined_call_operand.hbm [shape: bf16[96,96], index: 9, kind: input, shape index: {}]
  %s10 = inlined_call_operand.hbm [shape: f32[1,96], index: 10, kind: input, shape index: {}]
  %s11 = inlined_call_operand.hbm [shape: bf16[96,8], index: 11, kind: input, shape index: {}]
  %s12 = inlined_call_operand.hbm [shape: bf16[8,96], index: 12, kind: input, shape index: {}]
  %s13 = inlined_call_operand.hbm [shape: f32[24,32], index: 13, kind: output, shape index: {}]
  %s14 = sld [smem:[#allocation0]]
  $region114: #{tpu_custom_call.1} parent=0
    _
  %s16 = ssub.s32 1, %s14
  %s17 = scalar_select 0, %s16, %s14
  $region1: #{tpu_custom_call.1} parent=0
    #allocation2 [shape = 'u8[12288]{0}', space=vmem, size = 0x3000, scoped, tag = 'input window, operand 0, single buffered']
    #allocation3 [shape = 's32[1]{0}', space=sflag, size = 0x4, scoped, tag = 'scoped memory for tpu_custom_call.1']
    #allocation4 [shape = 's32[1]{0}', space=sflag, size = 0x4, scoped, tag = 'scoped memory for tpu_custom_call.1']
    #allocation5 [shape = 'u8[24576]{0}', space=vmem, size = 0x6000, scoped, tag = 'input window, operand 1, single buffered']
    #allocation6 [shape = 's32[1]{0}', space=sflag, size = 0x4, scoped, tag = 'scoped memory for tpu_custom_call.1']
    #allocation7 [shape = 'u8[2048]{0}', space=vmem, size = 0x800, scoped, tag = 'input window, operand 2, single buffered']
    #allocation8 [shape = 'u8[512]{0}', space=vmem, size = 0x400, scoped, tag = 'input window, operand 3, single buffered']
    #allocation9 [shape = 's32[1]{0}', space=sflag, size = 0x4, scoped, tag = 'scoped memory for tpu_custom_call.1']
    #allocation10 [shape = 'u8[2048]{0}', space=vmem, size = 0x800, scoped, tag = 'input window, operand 4, single buffered']
    #allocation11 [shape = 'u8[512]{0}', space=vmem, size = 0x400, scoped, tag = 'input window, operand 5, single buffered']
    #allocation12 [shape = 's32[1]{0}', space=sflag, size = 0x4, scoped, tag = 'scoped memory for tpu_custom_call.1']
    #allocation13 [shape = 'u8[512]{0}', space=vmem, size = 0x400, scoped, tag = 'input window, operand 6, single buffered']
    #allocation14 [shape = 'u8[73728]{0}', space=vmem, size = 0x12000, scoped, tag = 'input window, operand 7, single buffered']
    #allocation15 [shape = 's32[1]{0}', space=sflag, size = 0x4, scoped, tag = 'scoped memory for tpu_custom_call.1']
    #allocation16 [shape = 'u8[1536]{0}', space=vmem, size = 0x800, scoped, tag = 'input window, operand 8, single buffered']
    #allocation17 [shape = 'u8[24576]{0}', space=vmem, size = 0x6000, scoped, tag = 'input window, operand 9, single buffered']
    #allocation18 [shape = 's32[1]{0}', space=sflag, size = 0x4, scoped, tag = 'scoped memory for tpu_custom_call.1']
    #allocation19 [shape = 'u8[512]{0}', space=vmem, size = 0x400, scoped, tag = 'input window, operand 10, single buffered']
    #allocation20 [shape = 'u8[24576]{0}', space=vmem, size = 0x6000, scoped, tag = 'input window, operand 11, single buffered']
    #allocation21 [shape = 's32[1]{0}', space=sflag, size = 0x4, scoped, tag = 'scoped memory for tpu_custom_call.1']
    #allocation22 [shape = 'u8[2048]{0}', space=vmem, size = 0x800, scoped, tag = 'input window, operand 12, single buffered']
    #allocation23 [shape = 'u8[12288]{0}', space=vmem, size = 0x3000, scoped, tag = 'output window, operand 0, single buffered']
    %18 = vsyncpa [#allocation3], 0
    %19 = vsyncpa [#allocation6], 0
    %20 = vsyncpa [#allocation9], 0
    %21 = vsyncpa [#allocation12], 0
    %22 = vsyncpa [#allocation15], 0
    %23 = vsyncpa [#allocation18], 0
    %24 = vsyncpa [#allocation21], 0
    %25 = vsyncpa [#allocation4], 0
    // Predicated region
    $region2: #{tpu_custom_call.1} parent=1 // pred_check
      _
    $region3: #{tpu_custom_call.1} parent=1 // pred_check_branch
      %27 = sbr.rel (0) target = $region5
    $region4: #{tpu_custom_call.1} parent=1 // pred_region
      %s29 = ssub.s32 384, 384
      %30 = vsyncadd [#allocation3], %s29
      %s31 = sshll.u32 [#allocation2], 4
      %s32 = int_to_ptr.vmem [resolvable:$true] %s31
      %37 = dma.hbm_to_vmem [thread:$0]  %s0, 384, %s32, [#allocation3], 128, 128, 8
    $region5: #{tpu_custom_call.1} parent=1 // pred_fallthru
      _
    // Predicated region
    $region6: #{tpu_custom_call.1} parent=1 // pred_check
      _
    $region7: #{tpu_custom_call.1} parent=1 // pred_check_branch
      %39 = sbr.rel (0) target = $region9
    $region8: #{tpu_custom_call.1} parent=1 // pred_region
      %s41 = ssub.s32 768, 768
      %42 = vsyncadd [#allocation6], %s41
      %s43 = sshll.u32 [#allocation5], 4
      %s44 = int_to_ptr.vmem [resolvable:$true] %s43
      %49 = dma.hbm_to_vmem [thread:$0]  %s1, 768, %s44, [#allocation6], 128, 128, 8
    $region9: #{tpu_custom_call.1} parent=1 // pred_fallthru
      _
    // Predicated region
    $region10: #{tpu_custom_call.1} parent=1 // pred_check
      _
    $region11: #{tpu_custom_call.1} parent=1 // pred_check_branch
      %51 = sbr.rel (0) target = $region13
    $region12: #{tpu_custom_call.1} parent=1 // pred_region
      %s53 = ssub.s32 64, 64
      %54 = vsyncadd [#allocation6], %s53
      %s56 = sshll.u32 [#allocation7], 4
      %s57 = int_to_ptr.vmem [resolvable:$true] %s56
      %59 = dma.hbm_to_vmem [thread:$0]  %s2, 64, %s57, [#allocation6]
    $region13: #{tpu_custom_call.1} parent=1 // pred_fallthru
      _
    // Predicated region
    $region14: #{tpu_custom_call.1} parent=1 // pred_check
      _
    $region15: #{tpu_custom_call.1} parent=1 // pred_check_branch
      %61 = sbr.rel (0) target = $region17
    $region16: #{tpu_custom_call.1} parent=1 // pred_region
      %s63 = ssub.s32 16, 16
      %64 = vsyncadd [#allocation9], %s63
      %s66 = sshll.u32 [#allocation8], 4
      %s67 = int_to_ptr.vmem [resolvable:$true] %s66
      %69 = dma.hbm_to_vmem [thread:$0]  %s3, 16, %s67, [#allocation9]
    $region17: #{tpu_custom_call.1} parent=1 // pred_fallthru
      _
    // Predicated region
    $region18: #{tpu_custom_call.1} parent=1 // pred_check
      _
    $region19: #{tpu_custom_call.1} parent=1 // pred_check_branch
      %71 = sbr.rel (0) target = $region21
    $region20: #{tpu_custom_call.1} parent=1 // pred_region
      %s73 = ssub.s32 64, 64
      %74 = vsyncadd [#allocation9], %s73
      %s76 = sshll.u32 [#allocation10], 4
      %s77 = int_to_ptr.vmem [resolvable:$true] %s76
      %79 = dma.hbm_to_vmem [thread:$0]  %s4, 64, %s77, [#allocation9]
    $region21: #{tpu_custom_call.1} parent=1 // pred_fallthru
      _
    // Predicated region
    $region22: #{tpu_custom_call.1} parent=1 // pred_check
      _
    $region23: #{tpu_custom_call.1} parent=1 // pred_check_branch
      %81 = sbr.rel (0) target = $region25
    $region24: #{tpu_custom_call.1} parent=1 // pred_region
      %s83 = ssub.s32 16, 16
      %84 = vsyncadd [#allocation12], %s83
      %s86 = sshll.u32 [#allocation11], 4
      %s87 = int_to_ptr.vmem [resolvable:$true] %s86
      %89 = dma.hbm_to_vmem [thread:$0]  %s5, 16, %s87, [#allocation12]
    $region25: #{tpu_custom_call.1} parent=1 // pred_fallthru
      _
    // Predicated region
    $region26: #{tpu_custom_call.1} parent=1 // pred_check
      _
    $region27: #{tpu_custom_call.1} parent=1 // pred_check_branch
      %91 = sbr.rel (0) target = $region29
    $region28: #{tpu_custom_call.1} parent=1 // pred_region
      %s93 = ssub.s32 16, 16
      %94 = vsyncadd [#allocation12], %s93
      %s96 = sshll.u32 [#allocation13], 4
      %s97 = int_to_ptr.vmem [resolvable:$true] %s96
      %99 = dma.hbm_to_vmem [thread:$0]  %s6, 16, %s97, [#allocation12]
    $region29: #{tpu_custom_call.1} parent=1 // pred_fallthru
      _
    // Predicated region
    $region30: #{tpu_custom_call.1} parent=1 // pred_check
      _
    $region31: #{tpu_custom_call.1} parent=1 // pred_check_branch
      %101 = sbr.rel (0) target = $region33
    $region32: #{tpu_custom_call.1} parent=1 // pred_region
      %s103 = ssub.s32 2304, 2304
      %104 = vsyncadd [#allocation15], %s103
      %s105 = sshll.u32 [#allocation14], 4
      %s106 = int_to_ptr.vmem [resolvable:$true] %s105
      %111 = dma.hbm_to_vmem [thread:$0]  %s7, 2304, %s106, [#allocation15], 192, 192, 12
    $region33: #{tpu_custom_call.1} parent=1 // pred_fallthru
      _
    // Predicated region
    $region34: #{tpu_custom_call.1} parent=1 // pred_check
      _
    $region35: #{tpu_custom_call.1} parent=1 // pred_check_branch
      %113 = sbr.rel (0) target = $region37
    $region36: #{tpu_custom_call.1} parent=1 // pred_region
      %s115 = ssub.s32 48, 48
      %116 = vsyncadd [#allocation15], %s115
      %s118 = sshll.u32 [#allocation16], 4
      %s119 = int_to_ptr.vmem [resolvable:$true] %s118
      %121 = dma.hbm_to_vmem [thread:$0]  %s8, 48, %s119, [#allocation15]
    $region37: #{tpu_custom_call.1} parent=1 // pred_fallthru
      _
    // Predicated region
    $region38: #{tpu_custom_call.1} parent=1 // pred_check
      _
    $region39: #{tpu_custom_call.1} parent=1 // pred_check_branch
      %123 = sbr.rel (0) target = $region41
    $region40: #{tpu_custom_call.1} parent=1 // pred_region
      %s125 = ssub.s32 768, 768
      %126 = vsyncadd [#allocation18], %s125
      %s127 = sshll.u32 [#allocation17], 4
      %s128 = int_to_ptr.vmem [resolvable:$true] %s127
      %133 = dma.hbm_to_vmem [thread:$0]  %s9, 768, %s128, [#allocation18], 64, 64, 4
    $region41: #{tpu_custom_call.1} parent=1 // pred_fallthru
      _
    // Predicated region
    $region42: #{tpu_custom_call.1} parent=1 // pred_check
      _
    $region43: #{tpu_custom_call.1} parent=1 // pred_check_branch
      %135 = sbr.rel (0) target = $region45
    $region44: #{tpu_custom_call.1} parent=1 // pred_region
      %s137 = ssub.s32 16, 16
      %138 = vsyncadd [#allocation18], %s137
      %s140 = sshll.u32 [#allocation19], 4
      %s141 = int_to_ptr.vmem [resolvable:$true] %s140
      %143 = dma.hbm_to_vmem [thread:$0]  %s10, 16, %s141, [#allocation18]
    $region45: #{tpu_custom_call.1} parent=1 // pred_fallthru
      _
    // Predicated region
    $region46: #{tpu_custom_call.1} parent=1 // pred_check
      _
    $region47: #{tpu_custom_call.1} parent=1 // pred_check_branch
      %145 = sbr.rel (0) target = $region49
    $region48: #{tpu_custom_call.1} parent=1 // pred_region
      %s147 = ssub.s32 768, 768
      %148 = vsyncadd [#allocation21], %s147
      %s149 = sshll.u32 [#allocation20], 4
      %s150 = int_to_ptr.vmem [resolvable:$true] %s149
      %155 = dma.hbm_to_vmem [thread:$0]  %s11, 768, %s150, [#allocation21], 64, 64, 4
    $region49: #{tpu_custom_call.1} parent=1 // pred_fallthru
      _
    // Predicated region
    $region50: #{tpu_custom_call.1} parent=1 // pred_check
      _
    $region51: #{tpu_custom_call.1} parent=1 // pred_check_branch
      %157 = sbr.rel (0) target = $region53
    $region52: #{tpu_custom_call.1} parent=1 // pred_region
      %s159 = ssub.s32 64, 64
      %160 = vsyncadd [#allocation21], %s159
      %s162 = sshll.u32 [#allocation22], 4
      %s163 = int_to_ptr.vmem [resolvable:$true] %s162
      %165 = dma.hbm_to_vmem [thread:$0]  %s12, 64, %s163, [#allocation21]
    $region53: #{tpu_custom_call.1} parent=1 // pred_fallthru
      _
    // Predicated region
    $region54: #{tpu_custom_call.1} parent=1 // pred_check
      _
    $region55: #{tpu_custom_call.1} parent=1 // pred_check_branch
      %167 = sbr.rel (0) target = $region57
    $region56: #{tpu_custom_call.1} parent=1 // pred_region
      %168 = dma.done [#allocation3], 384
    $region57: #{tpu_custom_call.1} parent=1 // pred_fallthru
      _
    // Predicated region
    $region58: #{tpu_custom_call.1} parent=1 // pred_check
      _
    $region59: #{tpu_custom_call.1} parent=1 // pred_check_branch
      %170 = sbr.rel (0) target = $region61
    $region60: #{tpu_custom_call.1} parent=1 // pred_region
      %171 = dma.done [#allocation6], 768
    $region61: #{tpu_custom_call.1} parent=1 // pred_fallthru
      _
    // Predicated region
    $region62: #{tpu_custom_call.1} parent=1 // pred_check
      _
    $region63: #{tpu_custom_call.1} parent=1 // pred_check_branch
      %173 = sbr.rel (0) target = $region65
    $region64: #{tpu_custom_call.1} parent=1 // pred_region
      %174 = dma.done [#allocation6], 64
    $region65: #{tpu_custom_call.1} parent=1 // pred_fallthru
      _
    // Predicated region
    $region66: #{tpu_custom_call.1} parent=1 // pred_check
      _
    $region67: #{tpu_custom_call.1} parent=1 // pred_check_branch
      %176 = sbr.rel (0) target = $region69
    $region68: #{tpu_custom_call.1} parent=1 // pred_region
      %177 = dma.done [#allocation9], 16
    $region69: #{tpu_custom_call.1} parent=1 // pred_fallthru
      _
    // Predicated region
    $region70: #{tpu_custom_call.1} parent=1 // pred_check
      _
    $region71: #{tpu_custom_call.1} parent=1 // pred_check_branch
      %179 = sbr.rel (0) target = $region73
    $region72: #{tpu_custom_call.1} parent=1 // pred_region
      %180 = dma.done [#allocation9], 64
    $region73: #{tpu_custom_call.1} parent=1 // pred_fallthru
      _
    // Predicated region
    $region74: #{tpu_custom_call.1} parent=1 // pred_check
      _
    $region75: #{tpu_custom_call.1} parent=1 // pred_check_branch
      %182 = sbr.rel (0) target = $region77
    $region76: #{tpu_custom_call.1} parent=1 // pred_region
      %183 = dma.done [#allocation12], 16
    $region77: #{tpu_custom_call.1} parent=1 // pred_fallthru
      _
    // Predicated region
    $region78: #{tpu_custom_call.1} parent=1 // pred_check
      _
    $region79: #{tpu_custom_call.1} parent=1 // pred_check_branch
      %185 = sbr.rel (0) target = $region81
    $region80: #{tpu_custom_call.1} parent=1 // pred_region
      %186 = dma.done [#allocation12], 16
    $region81: #{tpu_custom_call.1} parent=1 // pred_fallthru
      _
    // Predicated region
    $region82: #{tpu_custom_call.1} parent=1 // pred_check
      _
    $region83: #{tpu_custom_call.1} parent=1 // pred_check_branch
      %188 = sbr.rel (0) target = $region85
    $region84: #{tpu_custom_call.1} parent=1 // pred_region
      %189 = dma.done [#allocation15], 2304
    $region85: #{tpu_custom_call.1} parent=1 // pred_fallthru
      _
    // Predicated region
    $region86: #{tpu_custom_call.1} parent=1 // pred_check
      _
    $region87: #{tpu_custom_call.1} parent=1 // pred_check_branch
      %191 = sbr.rel (0) target = $region89
    $region88: #{tpu_custom_call.1} parent=1 // pred_region
      %192 = dma.done [#allocation15], 48
    $region89: #{tpu_custom_call.1} parent=1 // pred_fallthru
      _
    // Predicated region
    $region90: #{tpu_custom_call.1} parent=1 // pred_check
      _
    $region91: #{tpu_custom_call.1} parent=1 // pred_check_branch
      %194 = sbr.rel (0) target = $region93
    $region92: #{tpu_custom_call.1} parent=1 // pred_region
      %195 = dma.done [#allocation18], 768
    $region93: #{tpu_custom_call.1} parent=1 // pred_fallthru
      _
    // Predicated region
    $region94: #{tpu_custom_call.1} parent=1 // pred_check
      _
    $region95: #{tpu_custom_call.1} parent=1 // pred_check_branch
      %197 = sbr.rel (0) target = $region97
    $region96: #{tpu_custom_call.1} parent=1 // pred_region
      %198 = dma.done [#allocation18], 16
    $region97: #{tpu_custom_call.1} parent=1 // pred_fallthru
      _
    // Predicated region
    $region98: #{tpu_custom_call.1} parent=1 // pred_check
      _
    $region99: #{tpu_custom_call.1} parent=1 // pred_check_branch
      %200 = sbr.rel (0) target = $region101
    $region100: #{tpu_custom_call.1} parent=1 // pred_region
      %201 = dma.done [#allocation21], 768
    $region101: #{tpu_custom_call.1} parent=1 // pred_fallthru
      _
    // Predicated region
    $region102: #{tpu_custom_call.1} parent=1 // pred_check
      _
    $region103: #{tpu_custom_call.1} parent=1 // pred_check_branch
      %203 = sbr.rel (0) target = $region105
    $region104: #{tpu_custom_call.1} parent=1 // pred_region
      %204 = dma.done [#allocation21], 64
    $region105: #{tpu_custom_call.1} parent=1 // pred_fallthru
      _
    %v206 = vld [vmem:[#allocation7] sm:$0xf]
    %v207 = vld [vmem:[#allocation10] sm:$0xf]
    %v208 = vld [vmem:[#allocation8] sm:$0x1]
    %v209 = vld [vmem:[#allocation11] sm:$0x1]
    %v210 = vld [vmem:[#allocation2] sm:$0xff]
    %v211 = vld [vmem:[#allocation2 + $0x8] sm:$0xff]
    %v212 = vld [vmem:[#allocation2 + $0x10] sm:$0xff]
    %v213 = vpack.c.bf16 %v211, %v210
    %v214 = vpack.c.bf16 %v212, %v212
    %v216 = vlaneseq
    %v217 = vshrl.u32 %v216, 7
    %v218 = vsub.s32 0, %v217
    %v219 = vrot.slane %v208, %v218
    %vm221 = vcmask 64512
    %v223 = vsel %vm221, %v213, 0
    %v226 = vsel %vm221, %v214, 0
    %vm228 = vcmask 1043456
    %v230 = vsel %vm228, %v206, 0
    %232 = vmatprep.subr.bf16.mxu0 0
    %233 = vmatpush1.bf16.msra.mxu0 %v230
    %234 = vmatprep.subr.bf16.mxu0 0
    %235 = vmatpush1.bf16.msra.mxu0 0
    %236 = vmatprep.subr.bf16.mxu0 0
    %237 = vmatpush1.bf16.msra.mxu0 0
    %238 = vmatprep.subr.bf16.mxu0 0
    %239 = vmatpush1.bf16.msra.mxu0 0
    %240 = vmatprep.subr.bf16.mxu0 0
    %241 = vmatpush1.bf16.msra.mxu0 0
    %242 = vmatprep.subr.bf16.mxu0 0
    %243 = vmatpush1.bf16.msra.mxu0 0
    %244 = vmatprep.subr.bf16.mxu0 0
    %245 = vmatpush1.bf16.msra.mxu0 0
    %246 = vmatprep.subr.bf16.mxu0 0
    %247 = vmatpush1.bf16.msra.mxu0 0
    %248 = vmatprep.subr.bf16.mxu0 0
    %249 = vmatpush1.bf16.msra.mxu0 0
    %250 = vmatprep.subr.bf16.mxu0 0
    %251 = vmatpush1.bf16.msra.mxu0 0
    %252 = vmatprep.subr.bf16.mxu0 0
    %253 = vmatpush1.bf16.msra.mxu0 0
    %254 = vmatprep.subr.bf16.mxu0 0
    %255 = vmatpush1.bf16.msra.mxu0 0
    %256 = vmatprep.subr.bf16.mxu0 0
    %257 = vmatpush1.bf16.msra.mxu0 0
    %258 = vmatprep.subr.bf16.mxu0 0
    %259 = vmatpush1.bf16.msra.mxu0 0
    %260 = vmatprep.subr.bf16.mxu0 0
    %261 = vmatpush1.bf16.msra.mxu0 0
    %262 = vmatprep.subr.bf16.mxu0 0
    %263 = vmatpush1.bf16.msra.mxu0 0
    %264 = vmatprep.mubr.bf16.mxu0 0
    %265 = vmatmul.mubr.bf16.gmra.mrb[0].mxu0 %v223
    %v266 = vpop.f32.mrb[0].mxu0
    %v267 = vadd.f32 %v219, %v266
    %v268 = vpop.f32.mrb[0].mxu0
    %v269 = vpop.f32.mrb[0].mxu0
    %v270 = vadd.f32 %v219, %v269
    %v271 = vpop.f32.mrb[0].mxu0
    %272 = vmatprep.mubr.bf16.mxu0 0
    %273 = vmatmul.mubr.bf16.gmra.mrb[0].mxu0 %v226
    %v274 = vpop.f32.mrb[0].mxu0
    %v275 = vadd.f32 %v219, %v274
    %v276 = vpop.f32.mrb[0].mxu0
    %v277 = vpop.f32.mrb[0].mxu0
    %v278 = vpop.f32.mrb[0].mxu0
    %279 = vdwg.mxu0
    %vm280 = vcmp.gt.f32.partialorder %v267, 0.0
    %vm281 = vcmp.gt.f32.partialorder %v270, 0.0
    %vm282 = vcmp.gt.f32.partialorder %v275, 0.0
    %v283 = vmul.f32 %v267, 0.01
    %v284 = vmul.f32 %v270, 0.01
    %v285 = vmul.f32 %v275, 0.01
    %v286 = vsel %vm280, %v267, %v283
    %v287 = vsel %vm281, %v270, %v284
    %v288 = vsel %vm282, %v275, %v285
    %v289 = vld [vmem:[#allocation5] sm:$0xff]
    %v290 = vld [vmem:[#allocation5 + $0x8] sm:$0xff]
    %v291 = vld [vmem:[#allocation5 + $0x10] sm:$0xff]
    %v292 = vpack.c.bf16 %v290, %v289
    %v293 = vpack.c.bf16 %v291, %v291
    %v295 = vlaneseq
    %v296 = vshrl.u32 %v295, 7
    %v297 = vsub.s32 0, %v296
    %v298 = vrot.slane %v209, %v297
    %v301 = vsel %vm221, %v292, 0
    %v304 = vsel %vm221, %v293, 0
    %v307 = vsel %vm228, %v207, 0
    %309 = vmatprep.subr.bf16.mxu0 0
    %310 = vmatpush1.bf16.msra.mxu0 %v307
    %311 = vmatprep.subr.bf16.mxu0 0
    %312 = vmatpush1.bf16.msra.mxu0 0
    %313 = vmatprep.subr.bf16.mxu0 0
    %314 = vmatpush1.bf16.msra.mxu0 0
    %315 = vmatprep.subr.bf16.mxu0 0
    %316 = vmatpush1.bf16.msra.mxu0 0
    %317 = vmatprep.subr.bf16.mxu0 0
    %318 = vmatpush1.bf16.msra.mxu0 0
    %319 = vmatprep.subr.bf16.mxu0 0
    %320 = vmatpush1.bf16.msra.mxu0 0
    %321 = vmatprep.subr.bf16.mxu0 0
    %322 = vmatpush1.bf16.msra.mxu0 0
    %323 = vmatprep.subr.bf16.mxu0 0
    %324 = vmatpush1.bf16.msra.mxu0 0
    %325 = vmatprep.subr.bf16.mxu0 0
    %326 = vmatpush1.bf16.msra.mxu0 0
    %327 = vmatprep.subr.bf16.mxu0 0
    %328 = vmatpush1.bf16.msra.mxu0 0
    %329 = vmatprep.subr.bf16.mxu0 0
    %330 = vmatpush1.bf16.msra.mxu0 0
    %331 = vmatprep.subr.bf16.mxu0 0
    %332 = vmatpush1.bf16.msra.mxu0 0
    %333 = vmatprep.subr.bf16.mxu0 0
    %334 = vmatpush1.bf16.msra.mxu0 0
    %335 = vmatprep.subr.bf16.mxu0 0
    %336 = vmatpush1.bf16.msra.mxu0 0
    %337 = vmatprep.subr.bf16.mxu0 0
    %338 = vmatpush1.bf16.msra.mxu0 0
    %339 = vmatprep.subr.bf16.mxu0 0
    %340 = vmatpush1.bf16.msra.mxu0 0
    %341 = vmatprep.mubr.bf16.mxu0 0
    %342 = vmatmul.mubr.bf16.gmra.mrb[0].mxu0 %v301
    %v343 = vpop.f32.mrb[0].mxu0
    %v344 = vadd.f32 %v298, %v343
    %v345 = vpop.f32.mrb[0].mxu0
    %v346 = vpop.f32.mrb[0].mxu0
    %v347 = vadd.f32 %v298, %v346
    %v348 = vpop.f32.mrb[0].mxu0
    %349 = vmatprep.mubr.bf16.mxu0 0
    %350 = vmatmul.mubr.bf16.gmra.mrb[0].mxu0 %v304
    %v351 = vpop.f32.mrb[0].mxu0
    %v352 = vadd.f32 %v298, %v351
    %v353 = vpop.f32.mrb[0].mxu0
    %v354 = vpop.f32.mrb[0].mxu0
    %v355 = vpop.f32.mrb[0].mxu0
    %356 = vdwg.mxu0
    %vm357 = vcmp.gt.f32.partialorder %v344, 0.0
    %vm358 = vcmp.gt.f32.partialorder %v347, 0.0
    %vm359 = vcmp.gt.f32.partialorder %v352, 0.0
    %v360 = vmul.f32 %v344, 0.01
    %v361 = vmul.f32 %v347, 0.01
    %v362 = vmul.f32 %v352, 0.01
    %v363 = vsel %vm357, %v344, %v360
    %v364 = vsel %vm358, %v347, %v361
    %v365 = vsel %vm359, %v352, %v362
    %s366 = scalar_lea.vmem [#allocation5], 24
    %v367 = vld [vmem:[%s366] sm:$0xff]
    %v368 = vld [vmem:[%s366 + $0x8] sm:$0xff]
    %v369 = vld [vmem:[%s366 + $0x10] sm:$0xff]
    %v370 = vpack.c.bf16 %v368, %v367
    %v371 = vpack.c.bf16 %v369, %v369
    %v373 = vsel %vm221, %v370, 0
    %v376 = vsel %vm221, %v371, 0
    %378 = vmatprep.subr.bf16.mxu0 0
    %379 = vmatpush1.bf16.msra.mxu0 %v307
    %380 = vmatprep.subr.bf16.mxu0 0
    %381 = vmatpush1.bf16.msra.mxu0 0
    %382 = vmatprep.subr.bf16.mxu0 0
    %383 = vmatpush1.bf16.msra.mxu0 0
    %384 = vmatprep.subr.bf16.mxu0 0
    %385 = vmatpush1.bf16.msra.mxu0 0
    %386 = vmatprep.subr.bf16.mxu0 0
    %387 = vmatpush1.bf16.msra.mxu0 0
    %388 = vmatprep.subr.bf16.mxu0 0
    %389 = vmatpush1.bf16.msra.mxu0 0
    %390 = vmatprep.subr.bf16.mxu0 0
    %391 = vmatpush1.bf16.msra.mxu0 0
    %392 = vmatprep.subr.bf16.mxu0 0
    %393 = vmatpush1.bf16.msra.mxu0 0
    %394 = vmatprep.subr.bf16.mxu0 0
    %395 = vmatpush1.bf16.msra.mxu0 0
    %396 = vmatprep.subr.bf16.mxu0 0
    %397 = vmatpush1.bf16.msra.mxu0 0
    %398 = vmatprep.subr.bf16.mxu0 0
    %399 = vmatpush1.bf16.msra.mxu0 0
    %400 = vmatprep.subr.bf16.mxu0 0
    %401 = vmatpush1.bf16.msra.mxu0 0
    %402 = vmatprep.subr.bf16.mxu0 0
    %403 = vmatpush1.bf16.msra.mxu0 0
    %404 = vmatprep.subr.bf16.mxu0 0
    %405 = vmatpush1.bf16.msra.mxu0 0
    %406 = vmatprep.subr.bf16.mxu0 0
    %407 = vmatpush1.bf16.msra.mxu0 0
    %408 = vmatprep.subr.bf16.mxu0 0
    %409 = vmatpush1.bf16.msra.mxu0 0
    %410 = vmatprep.mubr.bf16.mxu0 0
    %411 = vmatmul.mubr.bf16.gmra.mrb[0].mxu0 %v373
    %v412 = vpop.f32.mrb[0].mxu0
    %v413 = vadd.f32 %v298, %v412
    %v414 = vpop.f32.mrb[0].mxu0
    %v415 = vpop.f32.mrb[0].mxu0
    %v416 = vadd.f32 %v298, %v415
    %v417 = vpop.f32.mrb[0].mxu0
    %418 = vmatprep.mubr.bf16.mxu0 0
    %419 = vmatmul.mubr.bf16.gmra.mrb[0].mxu0 %v376
    %v420 = vpop.f32.mrb[0].mxu0
    %v421 = vadd.f32 %v298, %v420
    %v422 = vpop.f32.mrb[0].mxu0
    %v423 = vpop.f32.mrb[0].mxu0
    %v424 = vpop.f32.mrb[0].mxu0
    %425 = vdwg.mxu0
    %vm426 = vcmp.gt.f32.partialorder %v413, 0.0
    %vm427 = vcmp.gt.f32.partialorder %v416, 0.0
    %vm428 = vcmp.gt.f32.partialorder %v421, 0.0
    %v429 = vmul.f32 %v413, 0.01
    %v430 = vmul.f32 %v416, 0.01
    %v431 = vmul.f32 %v421, 0.01
    %v432 = vsel %vm426, %v413, %v429
    %v433 = vsel %vm427, %v416, %v430
    %v434 = vsel %vm428, %v421, %v431
    %438 = vrot.lane.b32.xlu0 %v363, 32
    %v439 = vpop.permute.xlu0 %438
    %440 = vrot.lane.b32.xlu0 %v364, 32
    %v441 = vpop.permute.xlu0 %440
    %442 = vrot.lane.b32.xlu0 %v365, 32
    %v443 = vpop.permute.xlu0 %442
    %450 = vrot.lane.b32.xlu0 %v432, 64
    %v451 = vpop.permute.xlu0 %450
    %452 = vrot.lane.b32.xlu0 %v433, 64
    %v453 = vpop.permute.xlu0 %452
    %454 = vrot.lane.b32.xlu0 %v434, 64
    %v455 = vpop.permute.xlu0 %454
    %vm459 = vcmask 261120
    %v460 = vsel %vm459, %v286, %v439
    %v461 = vsel %vm459, %v287, %v441
    %v462 = vsel %vm459, %v288, %v443
    %vm463 = vcmask 523264
    %v464 = vsel %vm463, %v460, %v451
    %v465 = vsel %vm463, %v461, %v453
    %v466 = vsel %vm463, %v462, %v455
    %v467 = vld [vmem:[#allocation13] sm:$0x1]
    %v469 = vlaneseq
    %v470 = vshrl.u32 %v469, 7
    %v471 = vsub.s32 0, %v470
    %v472 = vrot.slane %v467, %v471
    %v474 = vadd.f32 %v464, %v472
    %v475 = vadd.f32 %v465, %v472
    %v476 = vadd.f32 %v466, %v472
    %v477 = vld [vmem:[#allocation14] sm:$0xff]
    %v478 = vld [vmem:[#allocation14 + $0x8] sm:$0xf]
    %v479 = vld [vmem:[#allocation14 + $0xc] sm:$0xff]
    %v480 = vld [vmem:[#allocation14 + $0x14] sm:$0xf]
    %v481 = vld [vmem:[#allocation14 + $0x18] sm:$0xff]
    %v482 = vld [vmem:[#allocation14 + $0x20] sm:$0xf]
    %v483 = vld [vmem:[#allocation14 + $0x24] sm:$0xff]
    %v484 = vld [vmem:[#allocation14 + $0x2c] sm:$0xf]
    %v485 = vld [vmem:[#allocation14 + $0x30] sm:$0xff]
    %v486 = vld [vmem:[#allocation14 + $0x38] sm:$0xf]
    %v487 = vld [vmem:[#allocation14 + $0x3c] sm:$0xff]
    %v488 = vld [vmem:[#allocation14 + $0x44] sm:$0xf]
    %v489 = vld [vmem:[#allocation14 + $0x48] sm:$0xff]
    %v490 = vld [vmem:[#allocation14 + $0x50] sm:$0xf]
    %v491 = vld [vmem:[#allocation14 + $0x54] sm:$0xff]
    %v492 = vld [vmem:[#allocation14 + $0x5c] sm:$0xf]
    %v493 = vld [vmem:[#allocation14 + $0x60] sm:$0xff]
    %v494 = vld [vmem:[#allocation14 + $0x68] sm:$0xf]
    %v495 = vld [vmem:[#allocation14 + $0x6c] sm:$0xff]
    %v496 = vld [vmem:[#allocation14 + $0x74] sm:$0xf]
    %v497 = vld [vmem:[#allocation14 + $0x78] sm:$0xff]
    %v498 = vld [vmem:[#allocation14 + $0x80] sm:$0xf]
    %v499 = vld [vmem:[#allocation14 + $0x84] sm:$0xff]
    %v500 = vld [vmem:[#allocation14 + $0x8c] sm:$0xf]
    %v501 = vpack.c.bf16 %v475, %v474
    %v502 = vpack.c.bf16 %v476, %v476
    %v503 = vld [vmem:[#allocation16] sm:$0x7]
    %v505 = vlaneseq
    %v506 = vshrl.u32 %v505, 7
    %v507 = vsub.s32 0, %v506
    %v508 = vrot.slane %v503, %v507
    %v509 = vlaneseq
    %v510 = vshrl.u32 %v509, 7
    %v511 = vsub.s32 1, %v510
    %v512 = vrot.slane %v503, %v511
    %v513 = vlaneseq
    %v514 = vshrl.u32 %v513, 7
    %v515 = vsub.s32 2, %v514
    %v516 = vrot.slane %v503, %v515
    %v544 = vunpack.c.l.b16 %v477
    %v545 = vunpack.c.h.b16 %v477
    %v546 = vunpack.c.l.b16 %v478
    %v547 = vunpack.c.l.b16 %v479
    %v548 = vunpack.c.h.b16 %v479
    %v549 = vunpack.c.l.b16 %v480
    %v550 = vunpack.c.l.b16 %v481
    %v551 = vunpack.c.h.b16 %v481
    %v552 = vunpack.c.l.b16 %v482
    %v553 = vunpack.c.l.b16 %v483
    %v554 = vunpack.c.h.b16 %v483
    %v555 = vunpack.c.l.b16 %v484
    %v556 = vunpack.c.l.b16 %v485
    %v557 = vunpack.c.h.b16 %v485
    %v558 = vunpack.c.l.b16 %v486
    %v559 = vunpack.c.l.b16 %v487
    %v560 = vunpack.c.h.b16 %v487
    %v561 = vunpack.c.l.b16 %v488
    %v562 = vunpack.c.l.b16 %v489
    %v563 = vunpack.c.h.b16 %v489
    %v564 = vunpack.c.l.b16 %v490
    %v565 = vunpack.c.l.b16 %v491
    %v566 = vunpack.c.h.b16 %v491
    %v567 = vunpack.c.l.b16 %v492
    %v568 = vunpack.c.l.b16 %v493
    %v569 = vunpack.c.h.b16 %v493
    %v570 = vunpack.c.l.b16 %v494
    %v571 = vunpack.c.l.b16 %v495
    %v572 = vunpack.c.h.b16 %v495
    %v573 = vunpack.c.l.b16 %v496
    %v574 = vunpack.c.l.b16 %v497
    %v575 = vunpack.c.h.b16 %v497
    %v576 = vunpack.c.l.b16 %v498
    %v577 = vunpack.c.l.b16 %v499
    %v578 = vunpack.c.h.b16 %v499
    %v579 = vunpack.c.l.b16 %v500
    %v580 = vpack.c.b16 %v547, %v544
    %v581 = vpack.c.b16 %v548, %v545
    %v582 = vpack.c.b16 %v549, %v546
    %v583 = vpack.c.b16 %v553, %v550
    %v584 = vpack.c.b16 %v554, %v551
    %v585 = vpack.c.b16 %v555, %v552
    %v586 = vpack.c.b16 %v559, %v556
    %v587 = vpack.c.b16 %v560, %v557
    %v588 = vpack.c.b16 %v561, %v558
    %v589 = vpack.c.b16 %v565, %v562
    %v590 = vpack.c.b16 %v566, %v563
    %v591 = vpack.c.b16 %v567, %v564
    %v592 = vpack.c.b16 %v571, %v568
    %v593 = vpack.c.b16 %v572, %v569
    %v594 = vpack.c.b16 %v573, %v570
    %v595 = vpack.c.b16 %v577, %v574
    %v596 = vpack.c.b16 %v578, %v575
    %v597 = vpack.c.b16 %v579, %v576
    %vm616 = vcmask 785408
    %v618 = vsel %vm616, %v501, 0
    %v621 = vsel %vm616, %v502, 0
    %623 = vmatprep.subr.bf16.mxu0 %v581
    %624 = vmatpush1.bf16.msra.mxu0 %v580
    %625 = vmatprep.subr.bf16.mxu0 %v584
    %626 = vmatpush1.bf16.msra.mxu0 %v583
    %627 = vmatprep.subr.bf16.mxu0 %v587
    %628 = vmatpush1.bf16.msra.mxu0 %v586
    %629 = vmatprep.subr.bf16.mxu0 %v590
    %630 = vmatpush1.bf16.msra.mxu0 %v589
    %631 = vmatprep.subr.bf16.mxu0 %v593
    %632 = vmatpush1.bf16.msra.mxu0 %v592
    %633 = vmatprep.subr.bf16.mxu0 %v596
    %634 = vmatpush1.bf16.msra.mxu0 %v595
    %635 = vmatprep.subr.bf16.mxu0 0
    %636 = vmatpush1.bf16.msra.mxu0 0
    %637 = vmatprep.subr.bf16.mxu0 0
    %638 = vmatpush1.bf16.msra.mxu0 0
    %639 = vmatprep.subr.bf16.mxu0 0
    %640 = vmatpush1.bf16.msra.mxu0 0
    %641 = vmatprep.subr.bf16.mxu0 0
    %642 = vmatpush1.bf16.msra.mxu0 0
    %643 = vmatprep.subr.bf16.mxu0 0
    %644 = vmatpush1.bf16.msra.mxu0 0
    %645 = vmatprep.subr.bf16.mxu0 0
    %646 = vmatpush1.bf16.msra.mxu0 0
    %647 = vmatprep.subr.bf16.mxu0 0
    %648 = vmatpush1.bf16.msra.mxu0 0
    %649 = vmatprep.subr.bf16.mxu0 0
    %650 = vmatpush1.bf16.msra.mxu0 0
    %651 = vmatprep.subr.bf16.mxu0 0
    %652 = vmatpush1.bf16.msra.mxu0 0
    %653 = vmatprep.subr.bf16.mxu0 0
    %654 = vmatpush1.bf16.msra.mxu0 0
    %655 = vmatprep.mubr.bf16.mxu0 0
    %656 = vmatmul.mubr.bf16.gmra.mrb[0].mxu0 %v618
    %v657 = vpop.f32.mrb[0].mxu0
    %v658 = vadd.f32 %v508, %v657
    %v659 = vpop.f32.mrb[0].mxu0
    %v660 = vadd.f32 %v512, %v659
    %v661 = vpop.f32.mrb[0].mxu0
    %v662 = vadd.f32 %v508, %v661
    %v663 = vpop.f32.mrb[0].mxu0
    %v664 = vadd.f32 %v512, %v663
    %665 = vmatprep.mubr.bf16.mxu0 0
    %666 = vmatmul.mubr.bf16.gmra.mrb[0].mxu0 %v621
    %v667 = vpop.f32.mrb[0].mxu0
    %v668 = vadd.f32 %v508, %v667
    %v669 = vpop.f32.mrb[0].mxu0
    %v670 = vadd.f32 %v512, %v669
    %v671 = vpop.f32.mrb[0].mxu0
    %v672 = vpop.f32.mrb[0].mxu0
    %673 = vdwg.mxu0
    %674 = vmatprep.subr.bf16.mxu0 0
    %675 = vmatpush1.bf16.msra.mxu0 %v582
    %676 = vmatprep.subr.bf16.mxu0 0
    %677 = vmatpush1.bf16.msra.mxu0 %v585
    %678 = vmatprep.subr.bf16.mxu0 0
    %679 = vmatpush1.bf16.msra.mxu0 %v588
    %680 = vmatprep.subr.bf16.mxu0 0
    %681 = vmatpush1.bf16.msra.mxu0 %v591
    %682 = vmatprep.subr.bf16.mxu0 0
    %683 = vmatpush1.bf16.msra.mxu0 %v594
    %684 = vmatprep.subr.bf16.mxu0 0
    %685 = vmatpush1.bf16.msra.mxu0 %v597
    %686 = vmatprep.subr.bf16.mxu0 0
    %687 = vmatpush1.bf16.msra.mxu0 0
    %688 = vmatprep.subr.bf16.mxu0 0
    %689 = vmatpush1.bf16.msra.mxu0 0
    %690 = vmatprep.subr.bf16.mxu0 0
    %691 = vmatpush1.bf16.msra.mxu0 0
    %692 = vmatprep.subr.bf16.mxu0 0
    %693 = vmatpush1.bf16.msra.mxu0 0
    %694 = vmatprep.subr.bf16.mxu0 0
    %695 = vmatpush1.bf16.msra.mxu0 0
    %696 = vmatprep.subr.bf16.mxu0 0
    %697 = vmatpush1.bf16.msra.mxu0 0
    %698 = vmatprep.subr.bf16.mxu0 0
    %699 = vmatpush1.bf16.msra.mxu0 0
    %700 = vmatprep.subr.bf16.mxu0 0
    %701 = vmatpush1.bf16.msra.mxu0 0
    %702 = vmatprep.subr.bf16.mxu0 0
    %703 = vmatpush1.bf16.msra.mxu0 0
    %704 = vmatprep.subr.bf16.mxu0 0
    %705 = vmatpush1.bf16.msra.mxu0 0
    %706 = vmatprep.mubr.bf16.mxu0 0
    %707 = vmatmul.mubr.bf16.gmra.mrb[0].mxu0 %v618
    %v708 = vpop.f32.mrb[0].mxu0
    %v709 = vadd.f32 %v516, %v708
    %v710 = vpop.f32.mrb[0].mxu0
    %v711 = vpop.f32.mrb[0].mxu0
    %v712 = vadd.f32 %v516, %v711
    %v713 = vpop.f32.mrb[0].mxu0
    %714 = vmatprep.mubr.bf16.mxu0 0
    %715 = vmatmul.mubr.bf16.gmra.mrb[0].mxu0 %v621
    %v716 = vpop.f32.mrb[0].mxu0
    %v717 = vadd.f32 %v516, %v716
    %v718 = vpop.f32.mrb[0].mxu0
    %v719 = vpop.f32.mrb[0].mxu0
    %v720 = vpop.f32.mrb[0].mxu0
    %721 = vdwg.mxu0
    %v722 = vld [vmem:[#allocation20] sm:$0xf]
    %v723 = vld [vmem:[#allocation20 + $0x4] sm:$0xf]
    %v724 = vld [vmem:[#allocation20 + $0x8] sm:$0xf]
    %v725 = vld [vmem:[#allocation20 + $0xc] sm:$0xf]
    %v726 = vld [vmem:[#allocation20 + $0x10] sm:$0xf]
    %v727 = vld [vmem:[#allocation20 + $0x14] sm:$0xf]
    %v728 = vld [vmem:[#allocation20 + $0x18] sm:$0xf]
    %v729 = vld [vmem:[#allocation20 + $0x1c] sm:$0xf]
    %v730 = vld [vmem:[#allocation20 + $0x20] sm:$0xf]
    %v731 = vld [vmem:[#allocation20 + $0x24] sm:$0xf]
    %v732 = vld [vmem:[#allocation20 + $0x28] sm:$0xf]
    %v733 = vld [vmem:[#allocation20 + $0x2c] sm:$0xf]
    %737 = vrot.lane.b32.xlu0 %v658, 32
    %v738 = vpop.permute.xlu0 %737
    %739 = vrot.lane.b32.xlu0 %v662, 32
    %v740 = vpop.permute.xlu0 %739
    %741 = vrot.lane.b32.xlu0 %v668, 32
    %v742 = vpop.permute.xlu0 %741
    %746 = vrot.lane.b32.xlu0 %v658, 64
    %v747 = vpop.permute.xlu0 %746
    %748 = vrot.lane.b32.xlu0 %v662, 64
    %v749 = vpop.permute.xlu0 %748
    %750 = vrot.lane.b32.xlu0 %v668, 64
    %v751 = vpop.permute.xlu0 %750
    %755 = vrot.lane.b32.xlu0 %v658, 96
    %v756 = vpop.permute.xlu0 %755
    %757 = vrot.lane.b32.xlu0 %v662, 96
    %v758 = vpop.permute.xlu0 %757
    %759 = vrot.lane.b32.xlu0 %v668, 96
    %v760 = vpop.permute.xlu0 %759
    %v764 = vsel %vm459, %v738, %v747
    %v765 = vsel %vm459, %v740, %v749
    %v766 = vsel %vm459, %v742, %v751
    %v767 = vsel %vm463, %v764, %v756
    %v768 = vsel %vm463, %v765, %v758
    %v769 = vsel %vm463, %v766, %v760
    %773 = vrot.lane.b32.xlu0 %v660, 64
    %v774 = vpop.permute.xlu0 %773
    %775 = vrot.lane.b32.xlu0 %v664, 64
    %v776 = vpop.permute.xlu0 %775
    %777 = vrot.lane.b32.xlu0 %v670, 64
    %v778 = vpop.permute.xlu0 %777
    %782 = vrot.lane.b32.xlu0 %v660, 96
    %v783 = vpop.permute.xlu0 %782
    %784 = vrot.lane.b32.xlu0 %v664, 96
    %v785 = vpop.permute.xlu0 %784
    %786 = vrot.lane.b32.xlu0 %v670, 96
    %v787 = vpop.permute.xlu0 %786
    %v791 = vsel %vm459, %v774, %v783
    %v792 = vsel %vm459, %v776, %v785
    %v793 = vsel %vm459, %v778, %v787
    %v794 = vsel %vm463, %v791, %v660
    %v795 = vsel %vm463, %v792, %v664
    %v796 = vsel %vm463, %v793, %v670
    %v797 = vmul.f32 %v658, %v767
    %v798 = vmul.f32 %v662, %v768
    %v799 = vmul.f32 %v668, %v769
    %v800 = vpack.c.bf16 %v798, %v797
    %v801 = vpack.c.bf16 %v799, %v799
    %v814 = vunpack.c.l.b16 %v722
    %v815 = vunpack.c.l.b16 %v723
    %v816 = vunpack.c.l.b16 %v724
    %v817 = vunpack.c.l.b16 %v725
    %v818 = vunpack.c.l.b16 %v726
    %v819 = vunpack.c.l.b16 %v727
    %v820 = vunpack.c.l.b16 %v728
    %v821 = vunpack.c.l.b16 %v729
    %v822 = vunpack.c.l.b16 %v730
    %v823 = vunpack.c.l.b16 %v731
    %v824 = vunpack.c.l.b16 %v732
    %v825 = vunpack.c.l.b16 %v733
    %v826 = vpack.c.b16 %v815, %v814
    %v827 = vpack.c.b16 %v817, %v816
    %v828 = vpack.c.b16 %v819, %v818
    %v829 = vpack.c.b16 %v821, %v820
    %v830 = vpack.c.b16 %v823, %v822
    %v831 = vpack.c.b16 %v825, %v824
    %v839 = vsel %vm616, %v800, 0
    %v842 = vsel %vm616, %v801, 0
    %844 = vmatprep.subr.bf16.mxu0 0
    %845 = vmatpush1.bf16.msra.mxu0 %v826
    %846 = vmatprep.subr.bf16.mxu0 0
    %847 = vmatpush1.bf16.msra.mxu0 %v827
    %848 = vmatprep.subr.bf16.mxu0 0
    %849 = vmatpush1.bf16.msra.mxu0 %v828
    %850 = vmatprep.subr.bf16.mxu0 0
    %851 = vmatpush1.bf16.msra.mxu0 %v829
    %852 = vmatprep.subr.bf16.mxu0 0
    %853 = vmatpush1.bf16.msra.mxu0 %v830
    %854 = vmatprep.subr.bf16.mxu0 0
    %855 = vmatpush1.bf16.msra.mxu0 %v831
    %856 = vmatprep.subr.bf16.mxu0 0
    %857 = vmatpush1.bf16.msra.mxu0 0
    %858 = vmatprep.subr.bf16.mxu0 0
    %859 = vmatpush1.bf16.msra.mxu0 0
    %860 = vmatprep.subr.bf16.mxu0 0
    %861 = vmatpush1.bf16.msra.mxu0 0
    %862 = vmatprep.subr.bf16.mxu0 0
    %863 = vmatpush1.bf16.msra.mxu0 0
    %864 = vmatprep.subr.bf16.mxu0 0
    %865 = vmatpush1.bf16.msra.mxu0 0
    %866 = vmatprep.subr.bf16.mxu0 0
    %867 = vmatpush1.bf16.msra.mxu0 0
    %868 = vmatprep.subr.bf16.mxu0 0
    %869 = vmatpush1.bf16.msra.mxu0 0
    %870 = vmatprep.subr.bf16.mxu0 0
    %871 = vmatpush1.bf16.msra.mxu0 0
    %872 = vmatprep.subr.bf16.mxu0 0
    %873 = vmatpush1.bf16.msra.mxu0 0
    %874 = vmatprep.subr.bf16.mxu0 0
    %875 = vmatpush1.bf16.msra.mxu0 0
    %876 = vmatprep.mubr.bf16.mxu0 0
    %877 = vmatmul.mubr.bf16.gmra.mrb[0].mxu0 %v839
    %v878 = vpop.f32.mrb[0].mxu0
    %v879 = vadd.f32 0.0, %v878
    %v880 = vpop.f32.mrb[0].mxu0
    %v881 = vpop.f32.mrb[0].mxu0
    %v882 = vadd.f32 0.0, %v881
    %v883 = vpop.f32.mrb[0].mxu0
    %884 = vmatprep.mubr.bf16.mxu0 0
    %885 = vmatmul.mubr.bf16.gmra.mrb[0].mxu0 %v842
    %v886 = vpop.f32.mrb[0].mxu0
    %v887 = vadd.f32 0.0, %v886
    %v888 = vpop.f32.mrb[0].mxu0
    %v889 = vpop.f32.mrb[0].mxu0
    %v890 = vpop.f32.mrb[0].mxu0
    %891 = vdwg.mxu0
    %892 = vrot.lane.b32.xlu0 %v660, 32
    %v893 = vpop.permute.xlu0 %892
    %894 = vrot.lane.b32.xlu0 %v664, 32
    %v895 = vpop.permute.xlu0 %894
    %896 = vrot.lane.b32.xlu0 %v670, 32
    %v897 = vpop.permute.xlu0 %896
    %v901 = vsel %vm459, %v660, %v893
    %v902 = vsel %vm459, %v664, %v895
    %v903 = vsel %vm459, %v670, %v897
    %v904 = vsel %vm463, %v901, %v774
    %v905 = vsel %vm463, %v902, %v776
    %v906 = vsel %vm463, %v903, %v778
    %v907 = vsel %vm459, %v893, %v774
    %v908 = vsel %vm459, %v895, %v776
    %v909 = vsel %vm459, %v897, %v778
    %v910 = vsel %vm463, %v907, %v783
    %v911 = vsel %vm463, %v908, %v785
    %v912 = vsel %vm463, %v909, %v787
    %v913 = vmul.f32 %v658, %v904
    %v914 = vmul.f32 %v662, %v905
    %v915 = vmul.f32 %v668, %v906
    %v916 = vpack.c.bf16 %v914, %v913
    %v917 = vpack.c.bf16 %v915, %v915
    %v919 = vsel %vm616, %v916, 0
    %v922 = vsel %vm616, %v917, 0
    %924 = vmatprep.subr.bf16.mxu0 0
    %925 = vmatpush1.bf16.msra.mxu0 %v826
    %926 = vmatprep.subr.bf16.mxu0 0
    %927 = vmatpush1.bf16.msra.mxu0 %v827
    %928 = vmatprep.subr.bf16.mxu0 0
    %929 = vmatpush1.bf16.msra.mxu0 %v828
    %930 = vmatprep.subr.bf16.mxu0 0
    %931 = vmatpush1.bf16.msra.mxu0 %v829
    %932 = vmatprep.subr.bf16.mxu0 0
    %933 = vmatpush1.bf16.msra.mxu0 %v830
    %934 = vmatprep.subr.bf16.mxu0 0
    %935 = vmatpush1.bf16.msra.mxu0 %v831
    %936 = vmatprep.subr.bf16.mxu0 0
    %937 = vmatpush1.bf16.msra.mxu0 0
    %938 = vmatprep.subr.bf16.mxu0 0
    %939 = vmatpush1.bf16.msra.mxu0 0
    %940 = vmatprep.subr.bf16.mxu0 0
    %941 = vmatpush1.bf16.msra.mxu0 0
    %942 = vmatprep.subr.bf16.mxu0 0
    %943 = vmatpush1.bf16.msra.mxu0 0
    %944 = vmatprep.subr.bf16.mxu0 0
    %945 = vmatpush1.bf16.msra.mxu0 0
    %946 = vmatprep.subr.bf16.mxu0 0
    %947 = vmatpush1.bf16.msra.mxu0 0
    %948 = vmatprep.subr.bf16.mxu0 0
    %949 = vmatpush1.bf16.msra.mxu0 0
    %950 = vmatprep.subr.bf16.mxu0 0
    %951 = vmatpush1.bf16.msra.mxu0 0
    %952 = vmatprep.subr.bf16.mxu0 0
    %953 = vmatpush1.bf16.msra.mxu0 0
    %954 = vmatprep.subr.bf16.mxu0 0
    %955 = vmatpush1.bf16.msra.mxu0 0
    %956 = vmatprep.mubr.bf16.mxu0 0
    %957 = vmatmul.mubr.bf16.gmra.mrb[0].mxu0 %v919
    %v958 = vpop.f32.mrb[0].mxu0
    %v959 = vadd.f32 0.0, %v958
    %v960 = vpop.f32.mrb[0].mxu0
    %v961 = vpop.f32.mrb[0].mxu0
    %v962 = vadd.f32 0.0, %v961
    %v963 = vpop.f32.mrb[0].mxu0
    %964 = vmatprep.mubr.bf16.mxu0 0
    %965 = vmatmul.mubr.bf16.gmra.mrb[0].mxu0 %v922
    %v966 = vpop.f32.mrb[0].mxu0
    %v967 = vadd.f32 0.0, %v966
    %v968 = vpop.f32.mrb[0].mxu0
    %v969 = vpop.f32.mrb[0].mxu0
    %v970 = vpop.f32.mrb[0].mxu0
    %971 = vdwg.mxu0
    %v972 = vsel %vm459, %v783, %v660
    %v973 = vsel %vm459, %v785, %v664
    %v974 = vsel %vm459, %v787, %v670
    %v975 = vsel %vm463, %v972, %v893
    %v976 = vsel %vm463, %v973, %v895
    %v977 = vsel %vm463, %v974, %v897
    %981 = vrot.lane.b32.xlu0 %v709, 32
    %v982 = vpop.permute.xlu0 %981
    %983 = vrot.lane.b32.xlu0 %v712, 32
    %v984 = vpop.permute.xlu0 %983
    %985 = vrot.lane.b32.xlu0 %v717, 32
    %v986 = vpop.permute.xlu0 %985
    %990 = vrot.lane.b32.xlu0 %v709, 64
    %v991 = vpop.permute.xlu0 %990
    %992 = vrot.lane.b32.xlu0 %v712, 64
    %v993 = vpop.permute.xlu0 %992
    %994 = vrot.lane.b32.xlu0 %v717, 64
    %v995 = vpop.permute.xlu0 %994
    %v999 = vsel %vm459, %v709, %v982
    %v1000 = vsel %vm459, %v712, %v984
    %v1001 = vsel %vm459, %v717, %v986
    %v1002 = vsel %vm463, %v999, %v991
    %v1003 = vsel %vm463, %v1000, %v993
    %v1004 = vsel %vm463, %v1001, %v995
    %v1005 = vmul.f32 %v658, %v975
    %v1006 = vmul.f32 %v662, %v976
    %v1007 = vmul.f32 %v668, %v977
    %v1008 = vpack.c.bf16 %v1006, %v1005
    %v1009 = vpack.c.bf16 %v1007, %v1007
    %v1011 = vsel %vm616, %v1008, 0
    %v1014 = vsel %vm616, %v1009, 0
    %1016 = vmatprep.subr.bf16.mxu0 0
    %1017 = vmatpush1.bf16.msra.mxu0 %v826
    %1018 = vmatprep.subr.bf16.mxu0 0
    %1019 = vmatpush1.bf16.msra.mxu0 %v827
    %1020 = vmatprep.subr.bf16.mxu0 0
    %1021 = vmatpush1.bf16.msra.mxu0 %v828
    %1022 = vmatprep.subr.bf16.mxu0 0
    %1023 = vmatpush1.bf16.msra.mxu0 %v829
    %1024 = vmatprep.subr.bf16.mxu0 0
    %1025 = vmatpush1.bf16.msra.mxu0 %v830
    %1026 = vmatprep.subr.bf16.mxu0 0
    %1027 = vmatpush1.bf16.msra.mxu0 %v831
    %1028 = vmatprep.subr.bf16.mxu0 0
    %1029 = vmatpush1.bf16.msra.mxu0 0
    %1030 = vmatprep.subr.bf16.mxu0 0
    %1031 = vmatpush1.bf16.msra.mxu0 0
    %1032 = vmatprep.subr.bf16.mxu0 0
    %1033 = vmatpush1.bf16.msra.mxu0 0
    %1034 = vmatprep.subr.bf16.mxu0 0
    %1035 = vmatpush1.bf16.msra.mxu0 0
    %1036 = vmatprep.subr.bf16.mxu0 0
    %1037 = vmatpush1.bf16.msra.mxu0 0
    %1038 = vmatprep.subr.bf16.mxu0 0
    %1039 = vmatpush1.bf16.msra.mxu0 0
    %1040 = vmatprep.subr.bf16.mxu0 0
    %1041 = vmatpush1.bf16.msra.mxu0 0
    %1042 = vmatprep.subr.bf16.mxu0 0
    %1043 = vmatpush1.bf16.msra.mxu0 0
    %1044 = vmatprep.subr.bf16.mxu0 0
    %1045 = vmatpush1.bf16.msra.mxu0 0
    %1046 = vmatprep.subr.bf16.mxu0 0
    %1047 = vmatpush1.bf16.msra.mxu0 0
    %1048 = vmatprep.mubr.bf16.mxu0 0
    %1049 = vmatmul.mubr.bf16.gmra.mrb[0].mxu0 %v1011
    %v1050 = vpop.f32.mrb[0].mxu0
    %v1051 = vadd.f32 0.0, %v1050
    %v1052 = vpop.f32.mrb[0].mxu0
    %v1053 = vpop.f32.mrb[0].mxu0
    %v1054 = vadd.f32 0.0, %v1053
    %v1055 = vpop.f32.mrb[0].mxu0
    %1056 = vmatprep.mubr.bf16.mxu0 0
    %1057 = vmatmul.mubr.bf16.gmra.mrb[0].mxu0 %v1014
    %v1058 = vpop.f32.mrb[0].mxu0
    %v1059 = vadd.f32 0.0, %v1058
    %v1060 = vpop.f32.mrb[0].mxu0
    %v1061 = vpop.f32.mrb[0].mxu0
    %v1062 = vpop.f32.mrb[0].mxu0
    %1063 = vdwg.mxu0
    %v1064 = vmax.f32 %v879, %v959
    %v1065 = vmax.f32 %v882, %v962
    %v1066 = vmax.f32 %v887, %v967
    %v1067 = vmax.f32 %v1064, %v1051
    %v1068 = vmax.f32 %v1065, %v1054
    %v1069 = vmax.f32 %v1066, %v1059
    %v1070 = vsub.f32 %v879, %v1067
    %v1071 = vsub.f32 %v882, %v1068
    %v1072 = vsub.f32 %v887, %v1069
    %v1073 = vmul.f32 %v1070, 1.442695
    %v1074 = vpow.pop %v1073
    %v1075 = vmul.f32 %v1071, 1.442695
    %v1076 = vpow.pop %v1075
    %v1077 = vmul.f32 %v1072, 1.442695
    %v1078 = vpow.pop %v1077
    %v1079 = vsub.f32 %v959, %v1067
    %v1080 = vsub.f32 %v962, %v1068
    %v1081 = vsub.f32 %v967, %v1069
    %v1082 = vmul.f32 %v1079, 1.442695
    %v1083 = vpow.pop %v1082
    %v1084 = vmul.f32 %v1080, 1.442695
    %v1085 = vpow.pop %v1084
    %v1086 = vmul.f32 %v1081, 1.442695
    %v1087 = vpow.pop %v1086
    %v1088 = vsub.f32 %v1051, %v1067
    %v1089 = vsub.f32 %v1054, %v1068
    %v1090 = vsub.f32 %v1059, %v1069
    %v1091 = vmul.f32 %v1088, 1.442695
    %v1092 = vpow.pop %v1091
    %v1093 = vmul.f32 %v1089, 1.442695
    %v1094 = vpow.pop %v1093
    %v1095 = vmul.f32 %v1090, 1.442695
    %v1096 = vpow.pop %v1095
    %v1097 = vadd.f32 %v1074, %v1083
    %v1098 = vadd.f32 %v1076, %v1085
    %v1099 = vadd.f32 %v1078, %v1087
    %v1100 = vadd.f32 %v1097, %v1092
    %v1101 = vadd.f32 %v1098, %v1094
    %v1102 = vadd.f32 %v1099, %v1096
    %v1103 = vrcp.pop %v1100
    %v1104 = vrcp.pop %v1101
    %v1105 = vrcp.pop %v1102
    %v1106 = vld [vmem:[#allocation22] sm:$0xf]
    %v1107 = vmul.f32 %v1074, %v1103
    %v1108 = vmul.f32 %v1076, %v1104
    %v1109 = vmul.f32 %v1078, %v1105
    %v1110 = vpack.c.bf16 %v1108, %v1107
    %v1111 = vpack.c.bf16 %v1109, %v1109
    %v1113 = vsel %vm221, %v1110, 0
    %v1116 = vsel %vm221, %v1111, 0
    %v1119 = vsel %vm228, %v1106, 0
    %1121 = vmatprep.subr.bf16.mxu0 0
    %1122 = vmatpush1.bf16.msra.mxu0 %v1119
    %1123 = vmatprep.subr.bf16.mxu0 0
    %1124 = vmatpush1.bf16.msra.mxu0 0
    %1125 = vmatprep.subr.bf16.mxu0 0
    %1126 = vmatpush1.bf16.msra.mxu0 0
    %1127 = vmatprep.subr.bf16.mxu0 0
    %1128 = vmatpush1.bf16.msra.mxu0 0
    %1129 = vmatprep.subr.bf16.mxu0 0
    %1130 = vmatpush1.bf16.msra.mxu0 0
    %1131 = vmatprep.subr.bf16.mxu0 0
    %1132 = vmatpush1.bf16.msra.mxu0 0
    %1133 = vmatprep.subr.bf16.mxu0 0
    %1134 = vmatpush1.bf16.msra.mxu0 0
    %1135 = vmatprep.subr.bf16.mxu0 0
    %1136 = vmatpush1.bf16.msra.mxu0 0
    %1137 = vmatprep.subr.bf16.mxu0 0
    %1138 = vmatpush1.bf16.msra.mxu0 0
    %1139 = vmatprep.subr.bf16.mxu0 0
    %1140 = vmatpush1.bf16.msra.mxu0 0
    %1141 = vmatprep.subr.bf16.mxu0 0
    %1142 = vmatpush1.bf16.msra.mxu0 0
    %1143 = vmatprep.subr.bf16.mxu0 0
    %1144 = vmatpush1.bf16.msra.mxu0 0
    %1145 = vmatprep.subr.bf16.mxu0 0
    %1146 = vmatpush1.bf16.msra.mxu0 0
    %1147 = vmatprep.subr.bf16.mxu0 0
    %1148 = vmatpush1.bf16.msra.mxu0 0
    %1149 = vmatprep.subr.bf16.mxu0 0
    %1150 = vmatpush1.bf16.msra.mxu0 0
    %1151 = vmatprep.subr.bf16.mxu0 0
    %1152 = vmatpush1.bf16.msra.mxu0 0
    %1153 = vmatprep.mubr.bf16.mxu0 0
    %1154 = vmatmul.mubr.bf16.gmra.mrb[0].mxu0 %v1113
    %v1155 = vpop.f32.mrb[0].mxu0
    %v1156 = vadd.f32 0.0, %v1155
    %v1157 = vpop.f32.mrb[0].mxu0
    %v1158 = vpop.f32.mrb[0].mxu0
    %v1159 = vadd.f32 0.0, %v1158
    %v1160 = vpop.f32.mrb[0].mxu0
    %1161 = vmatprep.mubr.bf16.mxu0 0
    %1162 = vmatmul.mubr.bf16.gmra.mrb[0].mxu0 %v1116
    %v1163 = vpop.f32.mrb[0].mxu0
    %v1164 = vadd.f32 0.0, %v1163
    %v1165 = vpop.f32.mrb[0].mxu0
    %v1166 = vpop.f32.mrb[0].mxu0
    %v1167 = vpop.f32.mrb[0].mxu0
    %1168 = vdwg.mxu0
    %v1169 = vmul.f32 %v1156, %v794
    %v1170 = vmul.f32 %v1159, %v795
    %v1171 = vmul.f32 %v1164, %v796
    %v1172 = vmul.f32 %v1083, %v1103
    %v1173 = vmul.f32 %v1085, %v1104
    %v1174 = vmul.f32 %v1087, %v1105
    %v1175 = vpack.c.bf16 %v1173, %v1172
    %v1176 = vpack.c.bf16 %v1174, %v1174
    %v1178 = vsel %vm221, %v1175, 0
    %v1181 = vsel %vm221, %v1176, 0
    %1183 = vmatprep.subr.bf16.mxu0 0
    %1184 = vmatpush1.bf16.msra.mxu0 %v1119
    %1185 = vmatprep.subr.bf16.mxu0 0
    %1186 = vmatpush1.bf16.msra.mxu0 0
    %1187 = vmatprep.subr.bf16.mxu0 0
    %1188 = vmatpush1.bf16.msra.mxu0 0
    %1189 = vmatprep.subr.bf16.mxu0 0
    %1190 = vmatpush1.bf16.msra.mxu0 0
    %1191 = vmatprep.subr.bf16.mxu0 0
    %1192 = vmatpush1.bf16.msra.mxu0 0
    %1193 = vmatprep.subr.bf16.mxu0 0
    %1194 = vmatpush1.bf16.msra.mxu0 0
    %1195 = vmatprep.subr.bf16.mxu0 0
    %1196 = vmatpush1.bf16.msra.mxu0 0
    %1197 = vmatprep.subr.bf16.mxu0 0
    %1198 = vmatpush1.bf16.msra.mxu0 0
    %1199 = vmatprep.subr.bf16.mxu0 0
    %1200 = vmatpush1.bf16.msra.mxu0 0
    %1201 = vmatprep.subr.bf16.mxu0 0
    %1202 = vmatpush1.bf16.msra.mxu0 0
    %1203 = vmatprep.subr.bf16.mxu0 0
    %1204 = vmatpush1.bf16.msra.mxu0 0
    %1205 = vmatprep.subr.bf16.mxu0 0
    %1206 = vmatpush1.bf16.msra.mxu0 0
    %1207 = vmatprep.subr.bf16.mxu0 0
    %1208 = vmatpush1.bf16.msra.mxu0 0
    %1209 = vmatprep.subr.bf16.mxu0 0
    %1210 = vmatpush1.bf16.msra.mxu0 0
    %1211 = vmatprep.subr.bf16.mxu0 0
    %1212 = vmatpush1.bf16.msra.mxu0 0
    %1213 = vmatprep.subr.bf16.mxu0 0
    %1214 = vmatpush1.bf16.msra.mxu0 0
    %1215 = vmatprep.mubr.bf16.mxu0 0
    %1216 = vmatmul.mubr.bf16.gmra.mrb[0].mxu0 %v1178
    %v1217 = vpop.f32.mrb[0].mxu0
    %v1218 = vadd.f32 0.0, %v1217
    %v1219 = vpop.f32.mrb[0].mxu0
    %v1220 = vpop.f32.mrb[0].mxu0
    %v1221 = vadd.f32 0.0, %v1220
    %v1222 = vpop.f32.mrb[0].mxu0
    %1223 = vmatprep.mubr.bf16.mxu0 0
    %1224 = vmatmul.mubr.bf16.gmra.mrb[0].mxu0 %v1181
    %v1225 = vpop.f32.mrb[0].mxu0
    %v1226 = vadd.f32 0.0, %v1225
    %v1227 = vpop.f32.mrb[0].mxu0
    %v1228 = vpop.f32.mrb[0].mxu0
    %v1229 = vpop.f32.mrb[0].mxu0
    %1230 = vdwg.mxu0
    %v1231 = vmul.f32 %v1218, %v910
    %v1232 = vmul.f32 %v1221, %v911
    %v1233 = vmul.f32 %v1226, %v912
    %v1234 = vadd.f32 %v1169, %v1231
    %v1235 = vadd.f32 %v1170, %v1232
    %v1236 = vadd.f32 %v1171, %v1233
    %v1237 = vmul.f32 %v1092, %v1103
    %v1238 = vmul.f32 %v1094, %v1104
    %v1239 = vmul.f32 %v1096, %v1105
    %v1240 = vpack.c.bf16 %v1238, %v1237
    %v1241 = vpack.c.bf16 %v1239, %v1239
    %v1243 = vsel %vm221, %v1240, 0
    %v1246 = vsel %vm221, %v1241, 0
    %1248 = vmatprep.subr.bf16.mxu0 0
    %1249 = vmatpush1.bf16.msra.mxu0 %v1119
    %1250 = vmatprep.subr.bf16.mxu0 0
    %1251 = vmatpush1.bf16.msra.mxu0 0
    %1252 = vmatprep.subr.bf16.mxu0 0
    %1253 = vmatpush1.bf16.msra.mxu0 0
    %1254 = vmatprep.subr.bf16.mxu0 0
    %1255 = vmatpush1.bf16.msra.mxu0 0
    %1256 = vmatprep.subr.bf16.mxu0 0
    %1257 = vmatpush1.bf16.msra.mxu0 0
    %1258 = vmatprep.subr.bf16.mxu0 0
    %1259 = vmatpush1.bf16.msra.mxu0 0
    %1260 = vmatprep.subr.bf16.mxu0 0
    %1261 = vmatpush1.bf16.msra.mxu0 0
    %1262 = vmatprep.subr.bf16.mxu0 0
    %1263 = vmatpush1.bf16.msra.mxu0 0
    %1264 = vmatprep.subr.bf16.mxu0 0
    %1265 = vmatpush1.bf16.msra.mxu0 0
    %1266 = vmatprep.subr.bf16.mxu0 0
    %1267 = vmatpush1.bf16.msra.mxu0 0
    %1268 = vmatprep.subr.bf16.mxu0 0
    %1269 = vmatpush1.bf16.msra.mxu0 0
    %1270 = vmatprep.subr.bf16.mxu0 0
    %1271 = vmatpush1.bf16.msra.mxu0 0
    %1272 = vmatprep.subr.bf16.mxu0 0
    %1273 = vmatpush1.bf16.msra.mxu0 0
    %1274 = vmatprep.subr.bf16.mxu0 0
    %1275 = vmatpush1.bf16.msra.mxu0 0
    %1276 = vmatprep.subr.bf16.mxu0 0
    %1277 = vmatpush1.bf16.msra.mxu0 0
    %1278 = vmatprep.subr.bf16.mxu0 0
    %1279 = vmatpush1.bf16.msra.mxu0 0
    %1280 = vmatprep.mubr.bf16.mxu0 0
    %1281 = vmatmul.mubr.bf16.gmra.mrb[0].mxu0 %v1243
    %v1282 = vpop.f32.mrb[0].mxu0
    %v1283 = vadd.f32 0.0, %v1282
    %v1284 = vpop.f32.mrb[0].mxu0
    %v1285 = vpop.f32.mrb[0].mxu0
    %v1286 = vadd.f32 0.0, %v1285
    %v1287 = vpop.f32.mrb[0].mxu0
    %1288 = vmatprep.mubr.bf16.mxu0 0
    %1289 = vmatmul.mubr.bf16.gmra.mrb[0].mxu0 %v1246
    %v1290 = vpop.f32.mrb[0].mxu0
    %v1291 = vadd.f32 0.0, %v1290
    %v1292 = vpop.f32.mrb[0].mxu0
    %v1293 = vpop.f32.mrb[0].mxu0
    %v1294 = vpop.f32.mrb[0].mxu0
    %1295 = vdwg.mxu0
    %v1296 = vmul.f32 %v1283, %v1002
    %v1297 = vmul.f32 %v1286, %v1003
    %v1298 = vmul.f32 %v1291, %v1004
    %v1299 = vadd.f32 %v1234, %v1296
    %v1300 = vadd.f32 %v1235, %v1297
    %v1301 = vadd.f32 %v1236, %v1298
    %v1302 = vld [vmem:[#allocation17] sm:$0xf]
    %v1303 = vld [vmem:[#allocation17 + $0x4] sm:$0xf]
    %v1304 = vld [vmem:[#allocation17 + $0x8] sm:$0xf]
    %v1305 = vld [vmem:[#allocation17 + $0xc] sm:$0xf]
    %v1306 = vld [vmem:[#allocation17 + $0x10] sm:$0xf]
    %v1307 = vld [vmem:[#allocation17 + $0x14] sm:$0xf]
    %v1308 = vld [vmem:[#allocation17 + $0x18] sm:$0xf]
    %v1309 = vld [vmem:[#allocation17 + $0x1c] sm:$0xf]
    %v1310 = vld [vmem:[#allocation17 + $0x20] sm:$0xf]
    %v1311 = vld [vmem:[#allocation17 + $0x24] sm:$0xf]
    %v1312 = vld [vmem:[#allocation17 + $0x28] sm:$0xf]
    %v1313 = vld [vmem:[#allocation17 + $0x2c] sm:$0xf]
    %v1314 = vpack.c.bf16 %v1300, %v1299
    %v1315 = vpack.c.bf16 %v1301, %v1301
    %v1316 = vld [vmem:[#allocation19] sm:$0x1]
    %v1318 = vlaneseq
    %v1319 = vshrl.u32 %v1318, 7
    %v1320 = vsub.s32 0, %v1319
    %v1321 = vrot.slane %v1316, %v1320
    %v1335 = vunpack.c.l.b16 %v1302
    %v1336 = vunpack.c.l.b16 %v1303
    %v1337 = vunpack.c.l.b16 %v1304
    %v1338 = vunpack.c.l.b16 %v1305
    %v1339 = vunpack.c.l.b16 %v1306
    %v1340 = vunpack.c.l.b16 %v1307
    %v1341 = vunpack.c.l.b16 %v1308
    %v1342 = vunpack.c.l.b16 %v1309
    %v1343 = vunpack.c.l.b16 %v1310
    %v1344 = vunpack.c.l.b16 %v1311
    %v1345 = vunpack.c.l.b16 %v1312
    %v1346 = vunpack.c.l.b16 %v1313
    %v1347 = vpack.c.b16 %v1336, %v1335
    %v1348 = vpack.c.b16 %v1338, %v1337
    %v1349 = vpack.c.b16 %v1340, %v1339
    %v1350 = vpack.c.b16 %v1342, %v1341
    %v1351 = vpack.c.b16 %v1344, %v1343
    %v1352 = vpack.c.b16 %v1346, %v1345
    %v1360 = vsel %vm616, %v1314, 0
    %v1363 = vsel %vm616, %v1315, 0
    %1365 = vmatprep.subr.bf16.mxu0 0
    %1366 = vmatpush1.bf16.msra.mxu0 %v1347
    %1367 = vmatprep.subr.bf16.mxu0 0
    %1368 = vmatpush1.bf16.msra.mxu0 %v1348
    %1369 = vmatprep.subr.bf16.mxu0 0
    %1370 = vmatpush1.bf16.msra.mxu0 %v1349
    %1371 = vmatprep.subr.bf16.mxu0 0
    %1372 = vmatpush1.bf16.msra.mxu0 %v1350
    %1373 = vmatprep.subr.bf16.mxu0 0
    %1374 = vmatpush1.bf16.msra.mxu0 %v1351
    %1375 = vmatprep.subr.bf16.mxu0 0
    %1376 = vmatpush1.bf16.msra.mxu0 %v1352
    %1377 = vmatprep.subr.bf16.mxu0 0
    %1378 = vmatpush1.bf16.msra.mxu0 0
    %1379 = vmatprep.subr.bf16.mxu0 0
    %1380 = vmatpush1.bf16.msra.mxu0 0
    %1381 = vmatprep.subr.bf16.mxu0 0
    %1382 = vmatpush1.bf16.msra.mxu0 0
    %1383 = vmatprep.subr.bf16.mxu0 0
    %1384 = vmatpush1.bf16.msra.mxu0 0
    %1385 = vmatprep.subr.bf16.mxu0 0
    %1386 = vmatpush1.bf16.msra.mxu0 0
    %1387 = vmatprep.subr.bf16.mxu0 0
    %1388 = vmatpush1.bf16.msra.mxu0 0
    %1389 = vmatprep.subr.bf16.mxu0 0
    %1390 = vmatpush1.bf16.msra.mxu0 0
    %1391 = vmatprep.subr.bf16.mxu0 0
    %1392 = vmatpush1.bf16.msra.mxu0 0
    %1393 = vmatprep.subr.bf16.mxu0 0
    %1394 = vmatpush1.bf16.msra.mxu0 0
    %1395 = vmatprep.subr.bf16.mxu0 0
    %1396 = vmatpush1.bf16.msra.mxu0 0
    %1397 = vmatprep.mubr.bf16.mxu0 0
    %1398 = vmatmul.mubr.bf16.gmra.mrb[0].mxu0 %v1360
    %v1399 = vpop.f32.mrb[0].mxu0
    %v1400 = vadd.f32 %v1321, %v1399
    %v1401 = vpop.f32.mrb[0].mxu0
    %v1402 = vpop.f32.mrb[0].mxu0
    %v1403 = vadd.f32 %v1321, %v1402
    %v1404 = vpop.f32.mrb[0].mxu0
    %1405 = vmatprep.mubr.bf16.mxu0 0
    %1406 = vmatmul.mubr.bf16.gmra.mrb[0].mxu0 %v1363
    %v1407 = vpop.f32.mrb[0].mxu0
    %v1408 = vadd.f32 %v1321, %v1407
    %v1409 = vpop.f32.mrb[0].mxu0
    %v1410 = vpop.f32.mrb[0].mxu0
    %v1411 = vpop.f32.mrb[0].mxu0
    %1412 = vdwg.mxu0
    %v1413 = vadd.f32 %v1400, %v474
    %v1414 = vadd.f32 %v1403, %v475
    %v1415 = vadd.f32 %v1408, %v476
    %1419 = vrot.lane.b32.xlu0 %v1413, 96
    %v1420 = vpop.permute.xlu0 %1419
    %1421 = vrot.lane.b32.xlu0 %v1414, 96
    %v1422 = vpop.permute.xlu0 %1421
    %1423 = vrot.lane.b32.xlu0 %v1415, 96
    %v1424 = vpop.permute.xlu0 %1423
    %v1428 = vmax.f32 %v1413, %v1420
    %v1429 = vmax.f32 %v1414, %v1422
    %v1430 = vmax.f32 %v1415, %v1424
    %1431 = vrot.lane.b32.xlu0 %v1413, 64
    %v1432 = vpop.permute.xlu0 %1431
    %1433 = vrot.lane.b32.xlu0 %v1414, 64
    %v1434 = vpop.permute.xlu0 %1433
    %1435 = vrot.lane.b32.xlu0 %v1415, 64
    %v1436 = vpop.permute.xlu0 %1435
    %v1440 = vmax.f32 %v1428, %v1432
    %v1441 = vmax.f32 %v1429, %v1434
    %v1442 = vmax.f32 %v1430, %v1436
    %1443 = vst.msk [vmem:[#allocation23] sm:$0xff] %vm459, %v1440
    %1444 = vst.msk [vmem:[#allocation23 + $0x8] sm:$0xff] %vm459, %v1441
    %1445 = vst.msk [vmem:[#allocation23 + $0x10] sm:$0xff] %vm459, %v1442
    // Predicated region
    $region106: #{tpu_custom_call.1} parent=1 // pred_check
      _
    $region107: #{tpu_custom_call.1} parent=1 // pred_check_branch
      %1447 = sbr.rel (0) target = $region109
    $region108: #{tpu_custom_call.1} parent=1 // pred_region
      %s1449 = ssub.s32 384, 384
      %1450 = vsyncadd [#allocation4], %s1449
      %s1451 = sshll.u32 [#allocation23], 4
      %s1452 = int_to_ptr.vmem [resolvable:$true] %s1451
      %1457 = dma.vmem_to_hbm [thread:$0]  %s1452, 384, %s13, [#allocation4], 128, 128, 8
    $region109: #{tpu_custom_call.1} parent=1 // pred_fallthru
      _
    // Predicated region
    $region110: #{tpu_custom_call.1} parent=1 // pred_check
      _
    $region111: #{tpu_custom_call.1} parent=1 // pred_check_branch
      %1459 = sbr.rel (0) target = $region113
    $region112: #{tpu_custom_call.1} parent=1 // pred_region
      %1460 = dma.done [#allocation4], 384
    $region113: #{tpu_custom_call.1} parent=1 // pred_fallthru
      _
    %1461 = vsyncpa [#allocation3], 1
    %1462 = vsyncpa [#allocation6], 1
    %1463 = vsyncpa [#allocation9], 1
    %1464 = vsyncpa [#allocation12], 1
    %1465 = vsyncpa [#allocation15], 1
    %1466 = vsyncpa [#allocation18], 1
    %1467 = vsyncpa [#allocation21], 1
    %1468 = vsyncpa [#allocation4], 1

</llo_original>
